<compile_context>
chip_gen: v5e
topology: v5e:2x2
jax: 0.10.0
libtpu: 0.0.40
codegen_flags: <defaults>
</compile_context>

<pallas_src>
import math

import jax
import jax.numpy as jnp
from jax import lax
from jax.experimental import pallas as pl
from jax.experimental.pallas import tpu as pltpu


def _object_selector_kernel(
    lens_ref,          # VMEM i32[TILE_B, 1]
    obj_ref,           # VMEM f32[TILE_B, N_max, D_o]
    ctx_ref,           # VMEM f32[TILE_B, C]
    w0_ref, b0_ref,    # f32[D_o, H], f32[1, H]
    w1_ref, b1_ref,    # f32[H, H],   f32[1, H]
    wkv_ref, bkv_ref,  # f32[H, 2H],  f32[1, 2H]   (fused key/value projection)
    wq_ref, bq_ref,    # f32[C, H],   f32[1, H]
    emb_ref,           # VMEM f32[TILE_B, H]       (output)
    wts_ref,           # VMEM f32[TILE_B, N_max]   (output)
):
    tile_b, n_max, d_o = obj_ref.shape
    hidden = emb_ref.shape[-1]
    m_rows = tile_b * n_max

    # ---- object MLP: one big (TILE_B*N_max, .) matmul chain on the MXU ----
    x = obj_ref[...].reshape(m_rows, d_o)
    h = jnp.dot(x, w0_ref[...], preferred_element_type=jnp.float32) + b0_ref[...]
    h = jnp.maximum(h, 0.0)
    h = jnp.dot(h, w1_ref[...], preferred_element_type=jnp.float32) + b1_ref[...]
    h = jnp.maximum(h, 0.0)

    # ---- fused key/value projection: single (M, H) @ (H, 2H) matmul ----
    kv = jnp.dot(h, wkv_ref[...], preferred_element_type=jnp.float32) + bkv_ref[...]
    key3 = kv[:, :hidden].reshape(tile_b, n_max, hidden)    # (TILE_B, N_max, H)
    val3 = kv[:, hidden:].reshape(tile_b, n_max, hidden)    # (TILE_B, N_max, H)

    # ---- query projection for the whole tile; fold 1/sqrt(H) into q ----
    q = jnp.dot(ctx_ref[...], wq_ref[...], preferred_element_type=jnp.float32) + bq_ref[...]
    q = q * jnp.float32(1.0 / math.sqrt(hidden))            # (TILE_B, H)

    # ---- scaled dot-product logits, batched over the TILE_B groups ----
    logits = jnp.einsum("bqd,bkd->bqk", q[:, None, :], key3,
                        preferred_element_type=jnp.float32)[:, 0, :]   # (TILE_B, N_max)

    # ---- masked softmax over each group's valid objects ----
    n_ids = lax.broadcasted_iota(jnp.int32, (tile_b, n_max), 1)
    valid = n_ids < lens_ref[...]                            # (TILE_B, N_max)
    logits = jnp.where(valid, logits, jnp.float32(-1e30))    # finite mask, no inf-inf
    mx = jnp.max(logits, axis=1, keepdims=True)              # (TILE_B, 1)
    p = jnp.where(valid, jnp.exp(logits - mx), 0.0)
    s = jnp.sum(p, axis=1, keepdims=True)                    # (TILE_B, 1)
    # One reciprocal per group (clamp keeps length-0 padding groups finite).
    inv = pl.reciprocal(jnp.maximum(s, jnp.float32(1e-30)), approx=False)
    w = p * inv                                              # (TILE_B, N_max)

    # ---- weighted value reduction as a batched matmul on the MXU ----
    emb = jnp.einsum("bqk,bkd->bqd", w[:, None, :], val3,
                     preferred_element_type=jnp.float32)[:, 0, :]      # (TILE_B, H)

    emb_ref[...] = emb
    wts_ref[...] = w        # lane dim = N_max (full last dim) -> dense stores


def _round_up(x, m):
    return ((x + m - 1) // m) * m


def object_selector_pallas(objects_padded, lengths, context, params, *, tile_b=32):
    """objects_padded: f32[B, N_max, D_o]; lengths: i32[B]; context: f32[B, C].

    Returns (embedding f32[B, H], weights f32[B, N_max]) where weights[b, n]
    is valid only for n < lengths[b].
    """
    B, N_max, D_o = objects_padded.shape
    C = context.shape[-1]
    H = params["w0"].shape[1]

    # Keep the per-step group tile a multiple of 8 (sublane alignment) and pad
    # the group axis so the grid divides evenly.
    tile_b = int(tile_b)
    tile_b = max(8, min(tile_b, _round_up(B, 8)))
    tile_b = _round_up(tile_b, 8)
    B_pad = _round_up(B, tile_b)
    pad = B_pad - B
    if pad:
        objects_padded = jnp.pad(objects_padded, ((0, pad), (0, 0), (0, 0)))
        context = jnp.pad(context, ((0, pad), (0, 0)))
        lengths = jnp.pad(lengths, ((0, pad),))
    lens2d = lengths.astype(jnp.int32).reshape(B_pad, 1)

    full = lambda a: pl.BlockSpec(a.shape, lambda i, _nd=a.ndim: (0,) * _nd)

    grid_spec = pltpu.PrefetchScalarGridSpec(
        num_scalar_prefetch=0,
        grid=(B_pad // tile_b,),
        in_specs=[
            pl.BlockSpec((tile_b, 1), lambda i: (i, 0)),             # lengths
            pl.BlockSpec((tile_b, N_max, D_o), lambda i: (i, 0, 0)),  # objects
            pl.BlockSpec((tile_b, C), lambda i: (i, 0)),             # context
            full(params["w0"]), full(params["b0"]),
            full(params["w1"]), full(params["b1"]),
            full(params["wkv"]), full(params["bkv"]),
            full(params["wq"]), full(params["bq"]),
        ],
        out_specs=[
            pl.BlockSpec((tile_b, H), lambda i: (i, 0)),             # embedding
            pl.BlockSpec((tile_b, N_max), lambda i: (i, 0)),         # weights
        ],
    )

    emb, wts = pl.pallas_call(
        _object_selector_kernel,
        out_shape=(
            jax.ShapeDtypeStruct((B_pad, H), jnp.float32),
            jax.ShapeDtypeStruct((B_pad, N_max), jnp.float32),
        ),
        grid_spec=grid_spec,
        compiler_params=pltpu.CompilerParams(dimension_semantics=("parallel",)),
    )(lens2d, objects_padded, context,
      params["w0"], params["b0"], params["w1"], params["b1"],
      params["wkv"], params["bkv"], params["wq"], params["bq"])

    return emb[:B], wts[:B]


# ----------------------- pure-JAX reference (for checking) -----------------------
def object_selector_reference(objects_padded, lengths, context, params):
    H = params["w0"].shape[1]
    sections = [int(n) for n in lengths]
    x = jnp.concatenate([objects_padded[b, :n] for b, n in enumerate(sections)], axis=0)
    x = jax.nn.relu(x @ params["w0"] + params["b0"][0])
    x = jax.nn.relu(x @ params["w1"] + params["b1"][0])
    kv = x @ params["wkv"] + params["bkv"][0]
    key, value = kv[:, :H], kv[:, H:]
    q = context @ params["wq"] + params["bq"][0]
    query = jnp.concatenate(
        [jnp.broadcast_to(q[b], (n, H)) for b, n in enumerate(sections)], axis=0)
    logits = jnp.sum(key * query, axis=1, keepdims=True) / math.sqrt(H)
    offs, weights_list, embeddings = 0, [], []
    for n in sections:
        lg = logits[offs:offs + n]
        w = jax.nn.softmax(lg, axis=0)
        v = value[offs:offs + n]
        weights_list.append(w[:, 0])
        embeddings.append(jnp.sum(w * v, axis=0))
        offs += n
    return jnp.stack(embeddings, axis=0), weights_list


if __name__ == "__main__":
    hidden_size, context_size, object_size = 32, 16, 16
    N_max = 8
    B = 64            # 64 variable-size groups -> 2 grid steps of 32 groups
    TILE_B = 32

    key0 = jax.random.PRNGKey(0)
    keys = jax.random.split(key0, 12)

    def linear_init(kw, kb, fan_in, fan_out):
        bound = 1.0 / math.sqrt(fan_in)
        w = jax.random.uniform(kw, (fan_in, fan_out), jnp.float32, -bound, bound)
        b = jax.random.uniform(kb, (1, fan_out), jnp.float32, -bound, bound)
        return w, b

    w0, b0 = linear_init(keys[0], keys[1], object_size, hidden_size)
    w1, b1 = linear_init(keys[2], keys[3], hidden_size, hidden_size)
    wkv, bkv = linear_init(keys[4], keys[5], hidden_size, 2 * hidden_size)  # fused K/V
    wq, bq = linear_init(keys[6], keys[7], context_size, hidden_size)
    params = dict(w0=w0, b0=b0, w1=w1, b1=b1, wkv=wkv, bkv=bkv, wq=wq, bq=bq)

    # ragged groups: 1..N_max objects each, packed into a padded dense tensor
    lengths = jax.random.randint(keys[8], (B,), 1, N_max + 1).astype(jnp.int32)
    objs = jax.random.normal(keys[9], (B, N_max, object_size), jnp.float32)
    obj_row = jnp.arange(N_max)[None, :, None]
    objs = jnp.where(obj_row < lengths[:, None, None], objs, 0.0)  # zero padded rows
    context = jax.random.normal(keys[10], (B, context_size), jnp.float32)

    emb, wts = object_selector_pallas(objs, lengths, context, params, tile_b=TILE_B)
    emb = jax.block_until_ready(emb)
    wts = jax.block_until_ready(wts)

    # verify against the pure-JAX reference (same semantics as the PyTorch module)
    emb_ref, weights_ref = object_selector_reference(objs, lengths, context, params)
    assert jnp.allclose(emb, emb_ref, atol=1e-4, rtol=1e-4), (
        f"embedding mismatch, max err={float(jnp.max(jnp.abs(emb - emb_ref)))}")
    sections = [int(n) for n in lengths]
    for b, n in enumerate(sections):
        assert jnp.allclose(wts[b, :n], weights_ref[b], atol=1e-4, rtol=1e-4), (
            f"weights mismatch in group {b}")

    print("KERNEL_OK")
</pallas_src>

<mosaic_0001>
module attributes {stable_mosaic.version = 11 : i64} {
  func.func @_object_selector_kernel(%arg0: i32, %arg1: memref<32x1xi32, #tpu.memory_space<vmem>>, %arg2: memref<32x8x16xf32, #tpu.memory_space<vmem>>, %arg3: memref<32x16xf32, #tpu.memory_space<vmem>>, %arg4: memref<16x32xf32, #tpu.memory_space<vmem>>, %arg5: memref<1x32xf32, #tpu.memory_space<vmem>>, %arg6: memref<32x32xf32, #tpu.memory_space<vmem>>, %arg7: memref<1x32xf32, #tpu.memory_space<vmem>>, %arg8: memref<32x64xf32, #tpu.memory_space<vmem>>, %arg9: memref<1x64xf32, #tpu.memory_space<vmem>>, %arg10: memref<16x32xf32, #tpu.memory_space<vmem>>, %arg11: memref<1x32xf32, #tpu.memory_space<vmem>>, %arg12: memref<32x32xf32, #tpu.memory_space<vmem>>, %arg13: memref<32x8xf32, #tpu.memory_space<vmem>>) attributes {dimension_semantics = [#tpu.dimension_semantics<parallel>], iteration_bounds = array<i64: 2>, scalar_prefetch = 0 : i64, scratch_operands = 0 : i64, tpu.core_type = #tpu.core_type<tc>, window_params = [{transform_indices = @transform_0, window_bounds = array<i64: 32, 1>}, {transform_indices = @transform_1, window_bounds = array<i64: 32, 8, 16>}, {transform_indices = @transform_2, window_bounds = array<i64: 32, 16>}, {pipeline_mode = #tpu.pipeline_mode<synchronous>, transform_indices = @transform_3, window_bounds = array<i64: 16, 32>}, {pipeline_mode = #tpu.pipeline_mode<synchronous>, transform_indices = @transform_4, window_bounds = array<i64: 1, 32>}, {pipeline_mode = #tpu.pipeline_mode<synchronous>, transform_indices = @transform_5, window_bounds = array<i64: 32, 32>}, {pipeline_mode = #tpu.pipeline_mode<synchronous>, transform_indices = @transform_6, window_bounds = array<i64: 1, 32>}, {pipeline_mode = #tpu.pipeline_mode<synchronous>, transform_indices = @transform_7, window_bounds = array<i64: 32, 64>}, {pipeline_mode = #tpu.pipeline_mode<synchronous>, transform_indices = @transform_8, window_bounds = array<i64: 1, 64>}, {pipeline_mode = #tpu.pipeline_mode<synchronous>, transform_indices = @transform_9, window_bounds = array<i64: 16, 32>}, {pipeline_mode = #tpu.pipeline_mode<synchronous>, transform_indices = @transform_10, window_bounds = array<i64: 1, 32>}, {transform_indices = @transform_11, window_bounds = array<i64: 32, 32>}, {transform_indices = @transform_12, window_bounds = array<i64: 32, 8>}]} {
    %c0 = arith.constant 0 : index
    %c0_0 = arith.constant 0 : index
    %c0_1 = arith.constant 0 : index
    %0 = vector.load %arg2[%c0, %c0_0, %c0_1] : memref<32x8x16xf32, #tpu.memory_space<vmem>>, vector<32x8x16xf32>
    %1 = vector.shape_cast %0 : vector<32x8x16xf32> to vector<256x16xf32>
    %c0_2 = arith.constant 0 : index
    %c0_3 = arith.constant 0 : index
    %2 = vector.load %arg4[%c0_2, %c0_3] : memref<16x32xf32, #tpu.memory_space<vmem>>, vector<16x32xf32>
    %cst = arith.constant dense<0.000000e+00> : vector<256x32xf32>
    %3 = tpu.matmul %1, %2, %cst {dimension_numbers = #tpu.dot_dimension_numbers<[1], [0], [0], [1], [0, 0, 1, 1], [], []>} : vector<256x16xf32>, vector<16x32xf32>, vector<256x32xf32> -> vector<256x32xf32>
    %c0_4 = arith.constant 0 : index
    %c0_5 = arith.constant 0 : index
    %4 = vector.load %arg5[%c0_4, %c0_5] : memref<1x32xf32, #tpu.memory_space<vmem>>, vector<1x32xf32>
    %5 = vector.broadcast %4 : vector<1x32xf32> to vector<256x32xf32>
    %6 = arith.addf %3, %5 : vector<256x32xf32>
    %cst_6 = arith.constant 0.000000e+00 : f32
    %7 = vector.broadcast %cst_6 : f32 to vector<256x32xf32>
    %8 = arith.maximumf %6, %7 : vector<256x32xf32>
    %c0_7 = arith.constant 0 : index
    %c0_8 = arith.constant 0 : index
    %9 = vector.load %arg6[%c0_7, %c0_8] : memref<32x32xf32, #tpu.memory_space<vmem>>, vector<32x32xf32>
    %cst_9 = arith.constant dense<0.000000e+00> : vector<256x32xf32>
    %10 = tpu.matmul %8, %9, %cst_9 {dimension_numbers = #tpu.dot_dimension_numbers<[1], [0], [0], [1], [0, 0, 1, 1], [], []>} : vector<256x32xf32>, vector<32x32xf32>, vector<256x32xf32> -> vector<256x32xf32>
    %c0_10 = arith.constant 0 : index
    %c0_11 = arith.constant 0 : index
    %11 = vector.load %arg7[%c0_10, %c0_11] : memref<1x32xf32, #tpu.memory_space<vmem>>, vector<1x32xf32>
    %12 = vector.broadcast %11 : vector<1x32xf32> to vector<256x32xf32>
    %13 = arith.addf %10, %12 : vector<256x32xf32>
    %cst_12 = arith.constant 0.000000e+00 : f32
    %14 = vector.broadcast %cst_12 : f32 to vector<256x32xf32>
    %15 = arith.maximumf %13, %14 : vector<256x32xf32>
    %c0_13 = arith.constant 0 : index
    %c0_14 = arith.constant 0 : index
    %16 = vector.load %arg8[%c0_13, %c0_14] : memref<32x64xf32, #tpu.memory_space<vmem>>, vector<32x64xf32>
    %cst_15 = arith.constant dense<0.000000e+00> : vector<256x64xf32>
    %17 = tpu.matmul %15, %16, %cst_15 {dimension_numbers = #tpu.dot_dimension_numbers<[1], [0], [0], [1], [0, 0, 1, 1], [], []>} : vector<256x32xf32>, vector<32x64xf32>, vector<256x64xf32> -> vector<256x64xf32>
    %c0_16 = arith.constant 0 : index
    %c0_17 = arith.constant 0 : index
    %18 = vector.load %arg9[%c0_16, %c0_17] : memref<1x64xf32, #tpu.memory_space<vmem>>, vector<1x64xf32>
    %19 = vector.broadcast %18 : vector<1x64xf32> to vector<256x64xf32>
    %20 = arith.addf %17, %19 : vector<256x64xf32>
    %21 = vector.extract_strided_slice %20 {offsets = [0, 0], sizes = [256, 32], strides = [1, 1]} : vector<256x64xf32> to vector<256x32xf32>
    %22 = vector.shape_cast %21 : vector<256x32xf32> to vector<32x8x32xf32>
    %23 = vector.extract_strided_slice %20 {offsets = [0, 32], sizes = [256, 32], strides = [1, 1]} : vector<256x64xf32> to vector<256x32xf32>
    %24 = vector.shape_cast %23 : vector<256x32xf32> to vector<32x8x32xf32>
    %c0_18 = arith.constant 0 : index
    %c0_19 = arith.constant 0 : index
    %25 = vector.load %arg3[%c0_18, %c0_19] : memref<32x16xf32, #tpu.memory_space<vmem>>, vector<32x16xf32>
    %c0_20 = arith.constant 0 : index
    %c0_21 = arith.constant 0 : index
    %26 = vector.load %arg10[%c0_20, %c0_21] : memref<16x32xf32, #tpu.memory_space<vmem>>, vector<16x32xf32>
    %cst_22 = arith.constant dense<0.000000e+00> : vector<32x32xf32>
    %27 = tpu.matmul %25, %26, %cst_22 {dimension_numbers = #tpu.dot_dimension_numbers<[1], [0], [0], [1], [0, 0, 1, 1], [], []>} : vector<32x16xf32>, vector<16x32xf32>, vector<32x32xf32> -> vector<32x32xf32>
    %c0_23 = arith.constant 0 : index
    %c0_24 = arith.constant 0 : index
    %28 = vector.load %arg11[%c0_23, %c0_24] : memref<1x32xf32, #tpu.memory_space<vmem>>, vector<1x32xf32>
    %29 = vector.broadcast %28 : vector<1x32xf32> to vector<32x32xf32>
    %30 = arith.addf %27, %29 : vector<32x32xf32>
    %cst_25 = arith.constant 0.176776692 : f32
    %31 = vector.broadcast %cst_25 : f32 to vector<32x32xf32>
    %32 = arith.mulf %30, %31 : vector<32x32xf32>
    %33 = vector.shape_cast %32 : vector<32x32xf32> to vector<32x1x32xf32>
    "tpu.trace_start"() <{level = 10 : i32, message = "bqd,bkd->bqk"}> : () -> ()
    %cst_26 = arith.constant dense<0.000000e+00> : vector<32x1x8xf32>
    %34 = tpu.matmul %33, %22, %cst_26 {dimension_numbers = #tpu.dot_dimension_numbers<[2], [2], [1], [1], [0, 0, 0, 1, 1, 1], [0], [0]>} : vector<32x1x32xf32>, vector<32x8x32xf32>, vector<32x1x8xf32> -> vector<32x1x8xf32>
    "tpu.trace_stop"() : () -> ()
    %35 = vector.shape_cast %34 : vector<32x1x8xf32> to vector<32x8xf32>
    %36 = tpu.iota {dimensions = array<i32: 1>} : vector<32x8xi32>
    %c0_27 = arith.constant 0 : index
    %c0_28 = arith.constant 0 : index
    %37 = vector.load %arg1[%c0_27, %c0_28] : memref<32x1xi32, #tpu.memory_space<vmem>>, vector<32x1xi32>
    %38 = vector.broadcast %37 : vector<32x1xi32> to vector<32x8xi32>
    %39 = arith.cmpi slt, %36, %38 : vector<32x8xi32>
    %cst_29 = arith.constant -1.000000e+30 : f32
    %40 = vector.broadcast %cst_29 : f32 to vector<32x8xf32>
    %41 = arith.select %39, %35, %40 : vector<32x8xi1>, vector<32x8xf32>
    %cst_30 = arith.constant dense<0xFF800000> : vector<32xf32>
    %42 = vector.multi_reduction <maximumf>, %41, %cst_30 [1] : vector<32x8xf32> to vector<32xf32>
    %43 = vector.shape_cast %42 : vector<32xf32> to vector<32x1xf32>
    %44 = vector.broadcast %43 : vector<32x1xf32> to vector<32x8xf32>
    %45 = arith.subf %41, %44 : vector<32x8xf32>
    %46 = math.exp %45 : vector<32x8xf32>
    %cst_31 = arith.constant 0.000000e+00 : f32
    %47 = vector.broadcast %cst_31 : f32 to vector<32x8xf32>
    %48 = arith.select %39, %46, %47 : vector<32x8xi1>, vector<32x8xf32>
    %cst_32 = arith.constant dense<0.000000e+00> : vector<32xf32>
    %49 = vector.multi_reduction <add>, %48, %cst_32 [1] : vector<32x8xf32> to vector<32xf32>
    %50 = vector.shape_cast %49 : vector<32xf32> to vector<32x1xf32>
    %cst_33 = arith.constant 1.000000e-30 : f32
    %51 = vector.broadcast %cst_33 : f32 to vector<32x1xf32>
    %52 = arith.maximumf %50, %51 : vector<32x1xf32>
    %53 = tpu.reciprocal %52 : vector<32x1xf32> -> vector<32x1xf32>
    %54 = vector.broadcast %53 : vector<32x1xf32> to vector<32x8xf32>
    %55 = arith.mulf %48, %54 : vector<32x8xf32>
    %56 = vector.shape_cast %55 : vector<32x8xf32> to vector<32x1x8xf32>
    "tpu.trace_start"() <{level = 10 : i32, message = "bqk,bkd->bqd"}> : () -> ()
    %cst_34 = arith.constant dense<0.000000e+00> : vector<32x1x32xf32>
    %57 = tpu.matmul %56, %24, %cst_34 {dimension_numbers = #tpu.dot_dimension_numbers<[2], [1], [1], [2], [0, 0, 0, 1, 1, 2], [0], [0]>} : vector<32x1x8xf32>, vector<32x8x32xf32>, vector<32x1x32xf32> -> vector<32x1x32xf32>
    "tpu.trace_stop"() : () -> ()
    %58 = vector.shape_cast %57 : vector<32x1x32xf32> to vector<32x32xf32>
    %c0_35 = arith.constant 0 : index
    %c0_36 = arith.constant 0 : index
    %59 = vector.load %arg12[%c0_35, %c0_36] : memref<32x32xf32, #tpu.memory_space<vmem>>, vector<32x32xf32>
    tpu.vector_store %arg12[%c0_35, %c0_36], %58 {strides = array<i32>} : memref<32x32xf32, #tpu.memory_space<vmem>>, vector<32x32xf32>,
    %c0_37 = arith.constant 0 : index
    %c0_38 = arith.constant 0 : index
    %60 = vector.load %arg13[%c0_37, %c0_38] : memref<32x8xf32, #tpu.memory_space<vmem>>, vector<32x8xf32>
    tpu.vector_store %arg13[%c0_37, %c0_38], %55 {strides = array<i32>} : memref<32x8xf32, #tpu.memory_space<vmem>>, vector<32x8xf32>,
    return
  }
  func.func @transform_0(%arg0: i32) -> (i32, i32) {
    %c0_i32 = arith.constant 0 : i32
    %c0_i32_0 = arith.constant 0 : i32
    return %arg0, %c0_i32 : i32, i32
  }
  func.func @transform_1(%arg0: i32) -> (i32, i32, i32) {
    %c0_i32 = arith.constant 0 : i32
    %c0_i32_0 = arith.constant 0 : i32
    %c0_i32_1 = arith.constant 0 : i32
    return %arg0, %c0_i32, %c0_i32_0 : i32, i32, i32
  }
  func.func @transform_2(%arg0: i32) -> (i32, i32) {
    %c0_i32 = arith.constant 0 : i32
    %c0_i32_0 = arith.constant 0 : i32
    return %arg0, %c0_i32 : i32, i32
  }
  func.func @transform_3(%arg0: i32) -> (i32, i32) {
    %c0_i32 = arith.constant 0 : i32
    %c0_i32_0 = arith.constant 0 : i32
    %c0_i32_1 = arith.constant 0 : i32
    return %c0_i32, %c0_i32_0 : i32, i32
  }
  func.func @transform_4(%arg0: i32) -> (i32, i32) {
    %c0_i32 = arith.constant 0 : i32
    %c0_i32_0 = arith.constant 0 : i32
    %c0_i32_1 = arith.constant 0 : i32
    return %c0_i32, %c0_i32_0 : i32, i32
  }
  func.func @transform_5(%arg0: i32) -> (i32, i32) {
    %c0_i32 = arith.constant 0 : i32
    %c0_i32_0 = arith.constant 0 : i32
    %c0_i32_1 = arith.constant 0 : i32
    return %c0_i32, %c0_i32_0 : i32, i32
  }
  func.func @transform_6(%arg0: i32) -> (i32, i32) {
    %c0_i32 = arith.constant 0 : i32
    %c0_i32_0 = arith.constant 0 : i32
    %c0_i32_1 = arith.constant 0 : i32
    return %c0_i32, %c0_i32_0 : i32, i32
  }
  func.func @transform_7(%arg0: i32) -> (i32, i32) {
    %c0_i32 = arith.constant 0 : i32
    %c0_i32_0 = arith.constant 0 : i32
    %c0_i32_1 = arith.constant 0 : i32
    return %c0_i32, %c0_i32_0 : i32, i32
  }
  func.func @transform_8(%arg0: i32) -> (i32, i32) {
    %c0_i32 = arith.constant 0 : i32
    %c0_i32_0 = arith.constant 0 : i32
    %c0_i32_1 = arith.constant 0 : i32
    return %c0_i32, %c0_i32_0 : i32, i32
  }
  func.func @transform_9(%arg0: i32) -> (i32, i32) {
    %c0_i32 = arith.constant 0 : i32
    %c0_i32_0 = arith.constant 0 : i32
    %c0_i32_1 = arith.constant 0 : i32
    return %c0_i32, %c0_i32_0 : i32, i32
  }
  func.func @transform_10(%arg0: i32) -> (i32, i32) {
    %c0_i32 = arith.constant 0 : i32
    %c0_i32_0 = arith.constant 0 : i32
    %c0_i32_1 = arith.constant 0 : i32
    return %c0_i32, %c0_i32_0 : i32, i32
  }
  func.func @transform_11(%arg0: i32) -> (i32, i32) {
    %c0_i32 = arith.constant 0 : i32
    %c0_i32_0 = arith.constant 0 : i32
    return %arg0, %c0_i32 : i32, i32
  }
  func.func @transform_12(%arg0: i32) -> (i32, i32) {
    %c0_i32 = arith.constant 0 : i32
    %c0_i32_0 = arith.constant 0 : i32
    return %arg0, %c0_i32 : i32, i32
  }
}

</mosaic_0001>

<llo_original>
// kernel: tpu_custom_call.1
$region0: #{tpu_custom_call.1}
  #allocation0 [shape = 'u32[]', space=smem, size = 0x4, offset = 0x4, fixed_abs, tag = 'smem constant byte address 0x4 - core index']
  #allocation1 [shape = 'u32[72,128]{1,0:T(1,128)}', space=vmem, size = 0x9000, scoped, tag = 'internal scratch']
  %s0 = inlined_call_operand.vmem [shape: s32[64,1], index: 0, kind: input, shape index: {}]
  %s1 = inlined_call_operand.vmem [shape: f32[64,8,16], index: 1, kind: input, shape index: {}]
  %s2 = inlined_call_operand.vmem [shape: f32[64,16], index: 2, kind: input, shape index: {}]
  %s3 = inlined_call_operand.vmem [shape: f32[16,32], index: 3, kind: input, shape index: {}]
  %s4 = inlined_call_operand.vmem [shape: f32[1,32], index: 4, kind: input, shape index: {}]
  %s5 = inlined_call_operand.vmem [shape: f32[32,32], index: 5, kind: input, shape index: {}]
  %s6 = inlined_call_operand.vmem [shape: f32[1,32], index: 6, kind: input, shape index: {}]
  %s7 = inlined_call_operand.vmem [shape: f32[32,64], index: 7, kind: input, shape index: {}]
  %s8 = inlined_call_operand.vmem [shape: f32[1,64], index: 8, kind: input, shape index: {}]
  %s9 = inlined_call_operand.vmem [shape: f32[16,32], index: 9, kind: input, shape index: {}]
  %s10 = inlined_call_operand.vmem [shape: f32[1,32], index: 10, kind: input, shape index: {}]
  %s11 = inlined_call_operand.vmem [shape: f32[64,32], index: 11, kind: output, shape index: {0}]
  %s12 = inlined_call_operand.vmem [shape: f32[64,8], index: 12, kind: output, shape index: {1}]
  %13 = xla_tuple %s11, %s12
  %s14 = sld [smem:[#allocation0]]
  $region85: #{tpu_custom_call.1} parent=0
    _
  %s16 = ssub.s32 1, %s14
  %s17 = scalar_select 0, %s16, %s14
  loop: start=0, step=1, limit=4
  $region2: #{tpu_custom_call.1} parent=0 // loop_pre_header
    _
  $region3: #{tpu_custom_call.1} parent=0 // loop_header
    %s19 = sphi 0, %s23
    %p20 = scmp.ge.s32.totalorder %s19, 4
    %s29 = sphi 0, %s31
    %s32 = sphi 0, %s29
    %s33 = sphi 0, %s32
    %s49 = sphi 0, %s33
    %s55 = sphi 0, %s57
    %s58 = sphi 0, %s55
    %s59 = sphi 0, %s58
    %s75 = sphi 0, %s59
    %s81 = sphi 0, %s83
    %s84 = sphi 0, %s81
    %s85 = sphi 0, %s84
    %s101 = sphi 0, %s85
    %s105 = sphi 0, %s105
    %s107 = sphi 0, %s105
    %s108 = sphi 0, %s107
    %s122 = sphi 0, %s108
    %s126 = sphi 0, %s126
    %s128 = sphi 0, %s126
    %s129 = sphi 0, %s128
    %s143 = sphi 0, %s129
    %s147 = sphi 0, %s147
    %s149 = sphi 0, %s147
    %s150 = sphi 0, %s149
    %s164 = sphi 0, %s150
    %s168 = sphi 0, %s168
    %s170 = sphi 0, %s168
    %s171 = sphi 0, %s170
    %s185 = sphi 0, %s171
    %s189 = sphi 0, %s189
    %s191 = sphi 0, %s189
    %s192 = sphi 0, %s191
    %s206 = sphi 0, %s192
    %s210 = sphi 0, %s210
    %s212 = sphi 0, %s210
    %s213 = sphi 0, %s212
    %s227 = sphi 0, %s213
    %s231 = sphi 0, %s231
    %s233 = sphi 0, %s231
    %s234 = sphi 0, %s233
    %s248 = sphi 0, %s234
    %s252 = sphi 0, %s252
    %s254 = sphi 0, %s252
    %s255 = sphi 0, %s254
    %s269 = sphi 0, %s255
    %s275 = sphi 0, %s277
    %s278 = sphi 0, %s275
    %s279 = sphi 0, %s278
    %s295 = sphi 0, %s279
    %s301 = sphi 0, %s303
    %s304 = sphi 0, %s301
    %s305 = sphi 0, %s304
    %s321 = sphi 0, %s305
  $region4: #{tpu_custom_call.1} parent=0 // loop_header_branch
    %22 = sbr.rel (%p20) target = $region8
  $region5: #{tpu_custom_call.1} parent=0 // loop_body
    %s24 = ssub.s32 %s19, 1
    %s25 = ssub.s32 %s19, 2
    %s26 = sadd.s32 %s19, 1
    %s27 = ssub.s32 %s19, %s26
    %p28 = scmp.eq.s32.totalorder %s27, 0
    %s30 = sadd.s32 %s29, 1
    %s31 = scalar_select %p28, %s29, %s30
    %p34 = pneg %p28
    %p35 = scmp.eq.s32.totalorder %s19, 1
    %p36 = por %p34, %p35
    %p37 = scmp.ne.s32.totalorder %s29, %s32
    %p38 = scmp.eq.s32.totalorder %s19, 0
    %p39 = por %p37, %p38
    %p40 = scmp.ne.s32.totalorder %s29, %s32
    %p41 = scmp.eq.s32.totalorder %s24, 1
    %p42 = por %p40, %p41
    %p43 = scmp.ne.s32.totalorder %s32, %s33
    %p44 = scmp.eq.s32.totalorder %s24, 0
    %p45 = por %p43, %p44
    %p46 = scmp.ne.s32.totalorder %s32, %s33
    %p47 = scmp.eq.s32.totalorder %s25, 1
    %p48 = por %p46, %p47
    %p50 = scmp.ne.s32.totalorder %s33, %s49
    %p51 = scmp.eq.s32.totalorder %s25, 0
    %p52 = por %p50, %p51
    %s53 = ssub.s32 %s19, %s26
    %p54 = scmp.eq.s32.totalorder %s53, 0
    %s56 = sadd.s32 %s55, 1
    %s57 = scalar_select %p54, %s55, %s56
    %p60 = pneg %p54
    %p61 = scmp.eq.s32.totalorder %s19, 1
    %p62 = por %p60, %p61
    %p63 = scmp.ne.s32.totalorder %s55, %s58
    %p64 = scmp.eq.s32.totalorder %s19, 0
    %p65 = por %p63, %p64
    %p66 = scmp.ne.s32.totalorder %s55, %s58
    %p67 = scmp.eq.s32.totalorder %s24, 1
    %p68 = por %p66, %p67
    %p69 = scmp.ne.s32.totalorder %s58, %s59
    %p70 = scmp.eq.s32.totalorder %s24, 0
    %p71 = por %p69, %p70
    %p72 = scmp.ne.s32.totalorder %s58, %s59
    %p73 = scmp.eq.s32.totalorder %s25, 1
    %p74 = por %p72, %p73
    %p76 = scmp.ne.s32.totalorder %s59, %s75
    %p77 = scmp.eq.s32.totalorder %s25, 0
    %p78 = por %p76, %p77
    %s79 = ssub.s32 %s19, %s26
    %p80 = scmp.eq.s32.totalorder %s79, 0
    %s82 = sadd.s32 %s81, 1
    %s83 = scalar_select %p80, %s81, %s82
    %p86 = pneg %p80
    %p87 = scmp.eq.s32.totalorder %s19, 1
    %p88 = por %p86, %p87
    %p89 = scmp.ne.s32.totalorder %s81, %s84
    %p90 = scmp.eq.s32.totalorder %s19, 0
    %p91 = por %p89, %p90
    %p92 = scmp.ne.s32.totalorder %s81, %s84
    %p93 = scmp.eq.s32.totalorder %s24, 1
    %p94 = por %p92, %p93
    %p95 = scmp.ne.s32.totalorder %s84, %s85
    %p96 = scmp.eq.s32.totalorder %s24, 0
    %p97 = por %p95, %p96
    %p98 = scmp.ne.s32.totalorder %s84, %s85
    %p99 = scmp.eq.s32.totalorder %s25, 1
    %p100 = por %p98, %p99
    %p102 = scmp.ne.s32.totalorder %s85, %s101
    %p103 = scmp.eq.s32.totalorder %s25, 0
    %p104 = por %p102, %p103
    %s106 = sadd.s32 %s105, 1
    %p109 = scmp.eq.s32.totalorder %s19, 1
    %p110 = scmp.ne.s32.totalorder %s105, %s107
    %p111 = scmp.eq.s32.totalorder %s19, 0
    %p112 = por %p110, %p111
    %p113 = scmp.ne.s32.totalorder %s105, %s107
    %p114 = scmp.eq.s32.totalorder %s24, 1
    %p115 = por %p113, %p114
    %p116 = scmp.ne.s32.totalorder %s107, %s108
    %p117 = scmp.eq.s32.totalorder %s24, 0
    %p118 = por %p116, %p117
    %p119 = scmp.ne.s32.totalorder %s107, %s108
    %p120 = scmp.eq.s32.totalorder %s25, 1
    %p121 = por %p119, %p120
    %p123 = scmp.ne.s32.totalorder %s108, %s122
    %p124 = scmp.eq.s32.totalorder %s25, 0
    %p125 = por %p123, %p124
    %s127 = sadd.s32 %s126, 1
    %p130 = scmp.eq.s32.totalorder %s19, 1
    %p131 = scmp.ne.s32.totalorder %s126, %s128
    %p132 = scmp.eq.s32.totalorder %s19, 0
    %p133 = por %p131, %p132
    %p134 = scmp.ne.s32.totalorder %s126, %s128
    %p135 = scmp.eq.s32.totalorder %s24, 1
    %p136 = por %p134, %p135
    %p137 = scmp.ne.s32.totalorder %s128, %s129
    %p138 = scmp.eq.s32.totalorder %s24, 0
    %p139 = por %p137, %p138
    %p140 = scmp.ne.s32.totalorder %s128, %s129
    %p141 = scmp.eq.s32.totalorder %s25, 1
    %p142 = por %p140, %p141
    %p144 = scmp.ne.s32.totalorder %s129, %s143
    %p145 = scmp.eq.s32.totalorder %s25, 0
    %p146 = por %p144, %p145
    %s148 = sadd.s32 %s147, 1
    %p151 = scmp.eq.s32.totalorder %s19, 1
    %p152 = scmp.ne.s32.totalorder %s147, %s149
    %p153 = scmp.eq.s32.totalorder %s19, 0
    %p154 = por %p152, %p153
    %p155 = scmp.ne.s32.totalorder %s147, %s149
    %p156 = scmp.eq.s32.totalorder %s24, 1
    %p157 = por %p155, %p156
    %p158 = scmp.ne.s32.totalorder %s149, %s150
    %p159 = scmp.eq.s32.totalorder %s24, 0
    %p160 = por %p158, %p159
    %p161 = scmp.ne.s32.totalorder %s149, %s150
    %p162 = scmp.eq.s32.totalorder %s25, 1
    %p163 = por %p161, %p162
    %p165 = scmp.ne.s32.totalorder %s150, %s164
    %p166 = scmp.eq.s32.totalorder %s25, 0
    %p167 = por %p165, %p166
    %s169 = sadd.s32 %s168, 1
    %p172 = scmp.eq.s32.totalorder %s19, 1
    %p173 = scmp.ne.s32.totalorder %s168, %s170
    %p174 = scmp.eq.s32.totalorder %s19, 0
    %p175 = por %p173, %p174
    %p176 = scmp.ne.s32.totalorder %s168, %s170
    %p177 = scmp.eq.s32.totalorder %s24, 1
    %p178 = por %p176, %p177
    %p179 = scmp.ne.s32.totalorder %s170, %s171
    %p180 = scmp.eq.s32.totalorder %s24, 0
    %p181 = por %p179, %p180
    %p182 = scmp.ne.s32.totalorder %s170, %s171
    %p183 = scmp.eq.s32.totalorder %s25, 1
    %p184 = por %p182, %p183
    %p186 = scmp.ne.s32.totalorder %s171, %s185
    %p187 = scmp.eq.s32.totalorder %s25, 0
    %p188 = por %p186, %p187
    %s190 = sadd.s32 %s189, 1
    %p193 = scmp.eq.s32.totalorder %s19, 1
    %p194 = scmp.ne.s32.totalorder %s189, %s191
    %p195 = scmp.eq.s32.totalorder %s19, 0
    %p196 = por %p194, %p195
    %p197 = scmp.ne.s32.totalorder %s189, %s191
    %p198 = scmp.eq.s32.totalorder %s24, 1
    %p199 = por %p197, %p198
    %p200 = scmp.ne.s32.totalorder %s191, %s192
    %p201 = scmp.eq.s32.totalorder %s24, 0
    %p202 = por %p200, %p201
    %p203 = scmp.ne.s32.totalorder %s191, %s192
    %p204 = scmp.eq.s32.totalorder %s25, 1
    %p205 = por %p203, %p204
    %p207 = scmp.ne.s32.totalorder %s192, %s206
    %p208 = scmp.eq.s32.totalorder %s25, 0
    %p209 = por %p207, %p208
    %s211 = sadd.s32 %s210, 1
    %p214 = scmp.eq.s32.totalorder %s19, 1
    %p215 = scmp.ne.s32.totalorder %s210, %s212
    %p216 = scmp.eq.s32.totalorder %s19, 0
    %p217 = por %p215, %p216
    %p218 = scmp.ne.s32.totalorder %s210, %s212
    %p219 = scmp.eq.s32.totalorder %s24, 1
    %p220 = por %p218, %p219
    %p221 = scmp.ne.s32.totalorder %s212, %s213
    %p222 = scmp.eq.s32.totalorder %s24, 0
    %p223 = por %p221, %p222
    %p224 = scmp.ne.s32.totalorder %s212, %s213
    %p225 = scmp.eq.s32.totalorder %s25, 1
    %p226 = por %p224, %p225
    %p228 = scmp.ne.s32.totalorder %s213, %s227
    %p229 = scmp.eq.s32.totalorder %s25, 0
    %p230 = por %p228, %p229
    %s232 = sadd.s32 %s231, 1
    %p235 = scmp.eq.s32.totalorder %s19, 1
    %p236 = scmp.ne.s32.totalorder %s231, %s233
    %p237 = scmp.eq.s32.totalorder %s19, 0
    %p238 = por %p236, %p237
    %p239 = scmp.ne.s32.totalorder %s231, %s233
    %p240 = scmp.eq.s32.totalorder %s24, 1
    %p241 = por %p239, %p240
    %p242 = scmp.ne.s32.totalorder %s233, %s234
    %p243 = scmp.eq.s32.totalorder %s24, 0
    %p244 = por %p242, %p243
    %p245 = scmp.ne.s32.totalorder %s233, %s234
    %p246 = scmp.eq.s32.totalorder %s25, 1
    %p247 = por %p245, %p246
    %p249 = scmp.ne.s32.totalorder %s234, %s248
    %p250 = scmp.eq.s32.totalorder %s25, 0
    %p251 = por %p249, %p250
    %s253 = sadd.s32 %s252, 1
    %p256 = scmp.eq.s32.totalorder %s19, 1
    %p257 = scmp.ne.s32.totalorder %s252, %s254
    %p258 = scmp.eq.s32.totalorder %s19, 0
    %p259 = por %p257, %p258
    %p260 = scmp.ne.s32.totalorder %s252, %s254
    %p261 = scmp.eq.s32.totalorder %s24, 1
    %p262 = por %p260, %p261
    %p263 = scmp.ne.s32.totalorder %s254, %s255
    %p264 = scmp.eq.s32.totalorder %s24, 0
    %p265 = por %p263, %p264
    %p266 = scmp.ne.s32.totalorder %s254, %s255
    %p267 = scmp.eq.s32.totalorder %s25, 1
    %p268 = por %p266, %p267
    %p270 = scmp.ne.s32.totalorder %s255, %s269
    %p271 = scmp.eq.s32.totalorder %s25, 0
    %p272 = por %p270, %p271
    %s273 = ssub.s32 %s19, %s26
    %p274 = scmp.eq.s32.totalorder %s273, 0
    %s276 = sadd.s32 %s275, 1
    %s277 = scalar_select %p274, %s275, %s276
    %p280 = pneg %p274
    %p281 = scmp.eq.s32.totalorder %s19, 1
    %p282 = por %p280, %p281
    %p283 = scmp.ne.s32.totalorder %s275, %s278
    %p284 = scmp.eq.s32.totalorder %s19, 0
    %p285 = por %p283, %p284
    %p286 = scmp.ne.s32.totalorder %s275, %s278
    %p287 = scmp.eq.s32.totalorder %s24, 1
    %p288 = por %p286, %p287
    %p289 = scmp.ne.s32.totalorder %s278, %s279
    %p290 = scmp.eq.s32.totalorder %s24, 0
    %p291 = por %p289, %p290
    %p292 = scmp.ne.s32.totalorder %s278, %s279
    %p293 = scmp.eq.s32.totalorder %s25, 1
    %p294 = por %p292, %p293
    %p296 = scmp.ne.s32.totalorder %s279, %s295
    %p297 = scmp.eq.s32.totalorder %s25, 0
    %p298 = por %p296, %p297
    %s299 = ssub.s32 %s19, %s26
    %p300 = scmp.eq.s32.totalorder %s299, 0
    %s302 = sadd.s32 %s301, 1
    %s303 = scalar_select %p300, %s301, %s302
    %p306 = pneg %p300
    %p307 = scmp.eq.s32.totalorder %s19, 1
    %p308 = por %p306, %p307
    %p309 = scmp.ne.s32.totalorder %s301, %s304
    %p310 = scmp.eq.s32.totalorder %s19, 0
    %p311 = por %p309, %p310
    %p312 = scmp.ne.s32.totalorder %s301, %s304
    %p313 = scmp.eq.s32.totalorder %s24, 1
    %p314 = por %p312, %p313
    %p315 = scmp.ne.s32.totalorder %s304, %s305
    %p316 = scmp.eq.s32.totalorder %s24, 0
    %p317 = por %p315, %p316
    %p318 = scmp.ne.s32.totalorder %s304, %s305
    %p319 = scmp.eq.s32.totalorder %s25, 1
    %p320 = por %p318, %p319
    %p322 = scmp.ne.s32.totalorder %s305, %s321
    %p323 = scmp.eq.s32.totalorder %s25, 0
    %p324 = por %p322, %p323
    %p325 = scmp.le.s32.totalorder 1, %s19
    %p326 = scmp.lt.s32.totalorder %s19, 3
    %p327 = pnand %p325, %p326
    %p328 = pneg %p327
    // Predicated region
    $region9: #{tpu_custom_call.1} parent=5 // pred_check
      _
    $region10: #{tpu_custom_call.1} parent=5 // pred_check_branch
      %330 = sbr.rel (%p327) target = $region12
    $region11: #{tpu_custom_call.1} parent=5 // pred_region
      %s331 = ssub.s32 %s19, 1
      // Predicated region
      $region13: #{tpu_custom_call.1} parent=11 // pred_check
        %p332 = pneg %p118
      $region14: #{tpu_custom_call.1} parent=11 // pred_check_branch
        %334 = sbr.rel (%p332) target = $region16
      $region15: #{tpu_custom_call.1} parent=11 // pred_region
        _
      $region16: #{tpu_custom_call.1} parent=11 // pred_fallthru
        _
      // Predicated region
      $region17: #{tpu_custom_call.1} parent=11 // pred_check
        %p335 = pneg %p139
      $region18: #{tpu_custom_call.1} parent=11 // pred_check_branch
        %337 = sbr.rel (%p335) target = $region20
      $region19: #{tpu_custom_call.1} parent=11 // pred_region
        _
      $region20: #{tpu_custom_call.1} parent=11 // pred_fallthru
        _
      // Predicated region
      $region21: #{tpu_custom_call.1} parent=11 // pred_check
        %p338 = pneg %p160
      $region22: #{tpu_custom_call.1} parent=11 // pred_check_branch
        %340 = sbr.rel (%p338) target = $region24
      $region23: #{tpu_custom_call.1} parent=11 // pred_region
        _
      $region24: #{tpu_custom_call.1} parent=11 // pred_fallthru
        _
      // Predicated region
      $region25: #{tpu_custom_call.1} parent=11 // pred_check
        %p341 = pneg %p181
      $region26: #{tpu_custom_call.1} parent=11 // pred_check_branch
        %343 = sbr.rel (%p341) target = $region28
      $region27: #{tpu_custom_call.1} parent=11 // pred_region
        _
      $region28: #{tpu_custom_call.1} parent=11 // pred_fallthru
        _
      // Predicated region
      $region29: #{tpu_custom_call.1} parent=11 // pred_check
        %p344 = pneg %p202
      $region30: #{tpu_custom_call.1} parent=11 // pred_check_branch
        %346 = sbr.rel (%p344) target = $region32
      $region31: #{tpu_custom_call.1} parent=11 // pred_region
        _
      $region32: #{tpu_custom_call.1} parent=11 // pred_fallthru
        _
      // Predicated region
      $region33: #{tpu_custom_call.1} parent=11 // pred_check
        %p347 = pneg %p223
      $region34: #{tpu_custom_call.1} parent=11 // pred_check_branch
        %349 = sbr.rel (%p347) target = $region36
      $region35: #{tpu_custom_call.1} parent=11 // pred_region
        _
      $region36: #{tpu_custom_call.1} parent=11 // pred_fallthru
        _
      // Predicated region
      $region37: #{tpu_custom_call.1} parent=11 // pred_check
        %p350 = pneg %p244
      $region38: #{tpu_custom_call.1} parent=11 // pred_check_branch
        %352 = sbr.rel (%p350) target = $region40
      $region39: #{tpu_custom_call.1} parent=11 // pred_region
        _
      $region40: #{tpu_custom_call.1} parent=11 // pred_fallthru
        _
      // Predicated region
      $region41: #{tpu_custom_call.1} parent=11 // pred_check
        %p353 = pneg %p265
      $region42: #{tpu_custom_call.1} parent=11 // pred_check_branch
        %355 = sbr.rel (%p353) target = $region44
      $region43: #{tpu_custom_call.1} parent=11 // pred_region
        _
      $region44: #{tpu_custom_call.1} parent=11 // pred_fallthru
        _
    $region12: #{tpu_custom_call.1} parent=5 // pred_fallthru
      _
    %p356 = scmp.lt.s32.totalorder %s19, 2
    // Predicated region
    $region45: #{tpu_custom_call.1} parent=5 // pred_check
      %p357 = pneg %p356
    $region46: #{tpu_custom_call.1} parent=5 // pred_check_branch
      %359 = sbr.rel (%p357) target = $region48
    $region47: #{tpu_custom_call.1} parent=5 // pred_region
      // Predicated region
      $region49: #{tpu_custom_call.1} parent=47 // pred_check
        %p360 = pneg %p39
      $region50: #{tpu_custom_call.1} parent=47 // pred_check_branch
        %362 = sbr.rel (%p360) target = $region52
      $region51: #{tpu_custom_call.1} parent=47 // pred_region
        %s363 = smul.u32 4, %s19
        %p364 = scmp.lt.s32.totalorder %s363, 7
        %s365 = scalar_select %p364, %s363, 7
        %s366 = smul.addr %s365, 8
        %s367 = scalar_lea.vmem %s0, %s366
        %s368 = smul.u32 4, %s19
      $region52: #{tpu_custom_call.1} parent=47 // pred_fallthru
        _
      // Predicated region
      $region53: #{tpu_custom_call.1} parent=47 // pred_check
        %p369 = pneg %p65
      $region54: #{tpu_custom_call.1} parent=47 // pred_check_branch
        %371 = sbr.rel (%p369) target = $region56
      $region55: #{tpu_custom_call.1} parent=47 // pred_region
        %s372 = smul.u32 32, %s19
        %p373 = scmp.lt.s32.totalorder %s372, 63
        %s374 = scalar_select %p373, %s372, 63
        %s375 = smul.addr %s374, 8
        %s376 = scalar_lea.vmem %s1, %s375
        %s377 = smul.u32 32, %s19
      $region56: #{tpu_custom_call.1} parent=47 // pred_fallthru
        _
      // Predicated region
      $region57: #{tpu_custom_call.1} parent=47 // pred_check
        %p378 = pneg %p91
      $region58: #{tpu_custom_call.1} parent=47 // pred_check_branch
        %380 = sbr.rel (%p378) target = $region60
      $region59: #{tpu_custom_call.1} parent=47 // pred_region
        %s381 = smul.u32 4, %s19
        %p382 = scmp.lt.s32.totalorder %s381, 7
        %s383 = scalar_select %p382, %s381, 7
        %s384 = smul.addr %s383, 8
        %s385 = scalar_lea.vmem %s2, %s384
        %s386 = smul.u32 4, %s19
      $region60: #{tpu_custom_call.1} parent=47 // pred_fallthru
        _
    $region48: #{tpu_custom_call.1} parent=5 // pred_fallthru
      _
    %p387 = scmp.le.s32.totalorder 1, %s19
    %p388 = scmp.lt.s32.totalorder %s19, 3
    %p389 = pnand %p387, %p388
    %p390 = pneg %p389
    // Predicated region
    $region61: #{tpu_custom_call.1} parent=5 // pred_check
      _
    $region62: #{tpu_custom_call.1} parent=5 // pred_check_branch
      %392 = sbr.rel (%p389) target = $region64
    $region63: #{tpu_custom_call.1} parent=5 // pred_region
      %s393 = ssub.s32 %s19, 1
      %s394 = smul.u32 4, %s24
      %p395 = scmp.lt.s32.totalorder %s394, 7
      %s396 = scalar_select %p395, %s394, 7
      %s397 = smul.addr %s396, 8
      %s398 = scalar_lea.vmem %s0, %s397
      %p399 = pneg %p45
      %p400 = pneg %p42
      %s401 = smul.u32 32, %s24
      %p402 = scmp.lt.s32.totalorder %s401, 63
      %s403 = scalar_select %p402, %s401, 63
      %s404 = smul.addr %s403, 8
      %s405 = scalar_lea.vmem %s1, %s404
      %p406 = pneg %p71
      %p407 = pneg %p68
      %s408 = smul.u32 4, %s24
      %p409 = scmp.lt.s32.totalorder %s408, 7
      %s410 = scalar_select %p409, %s408, 7
      %s411 = smul.addr %s410, 8
      %s412 = scalar_lea.vmem %s2, %s411
      %p413 = pneg %p97
      %p414 = pneg %p94
      %p415 = pneg %p118
      %p416 = pneg %p115
      %p417 = pneg %p139
      %p418 = pneg %p136
      %p419 = pneg %p160
      %p420 = pneg %p157
      %p421 = pneg %p181
      %p422 = pneg %p178
      %p423 = pneg %p202
      %p424 = pneg %p199
      %p425 = pneg %p223
      %p426 = pneg %p220
      %p427 = pneg %p244
      %p428 = pneg %p241
      %p429 = pneg %p265
      %p430 = pneg %p262
      %p431 = pneg %p291
      %p432 = pneg %p288
      %s433 = smul.u32 4, %s24
      %p434 = scmp.lt.s32.totalorder %s433, 7
      %s435 = scalar_select %p434, %s433, 7
      %s436 = smul.addr %s435, 8
      %s437 = scalar_lea.vmem %s11, %s436
      %p438 = pneg %p317
      %p439 = pneg %p314
      %s440 = smul.u32 4, %s24
      %p441 = scmp.lt.s32.totalorder %s440, 7
      %s442 = scalar_select %p441, %s440, 7
      %s443 = smul.addr %s442, 8
      %s444 = scalar_lea.vmem %s12, %s443
      %s445 = smul.u32 4, %s24
      %p446 = scmp.lt.s32.totalorder %s445, 7
      %s447 = scalar_select %p446, %s445, 7
      %s448 = smul.addr %s447, 8
      %s449 = scalar_lea.vmem %s0, %s448
      %s450 = smul.u32 4, %s24
      %s451 = smul.u32 32, %s24
      %p452 = scmp.lt.s32.totalorder %s451, 63
      %s453 = scalar_select %p452, %s451, 63
      %s454 = smul.addr %s453, 8
      %s455 = scalar_lea.vmem %s1, %s454
      %s456 = smul.u32 32, %s24
      %s457 = smul.u32 4, %s24
      %p458 = scmp.lt.s32.totalorder %s457, 7
      %s459 = scalar_select %p458, %s457, 7
      %s460 = smul.addr %s459, 8
      %s461 = scalar_lea.vmem %s2, %s460
      %s462 = smul.u32 4, %s24
      %s463 = smul.u32 4, %s24
      %p464 = scmp.lt.s32.totalorder %s463, 7
      %s465 = scalar_select %p464, %s463, 7
      %s466 = smul.addr %s465, 8
      %s467 = scalar_lea.vmem %s11, %s466
      %s468 = smul.u32 4, %s24
      %s469 = smul.u32 4, %s24
      %p470 = scmp.lt.s32.totalorder %s469, 7
      %s471 = scalar_select %p470, %s469, 7
      %s472 = smul.addr %s471, 8
      %s473 = scalar_lea.vmem %s12, %s472
      %s474 = smul.u32 4, %s24
      %v475 = vld [vmem:[%s455] sm:$0xff]
      %v476 = vld [vmem:[%s455 + $0x8] sm:$0xff]
      %v477 = vld [vmem:[%s455 + $0x10] sm:$0xff]
      %v478 = vld [vmem:[%s455 + $0x18] sm:$0xff]
      %v479 = vld [vmem:[%s455 + $0x20] sm:$0xff]
      %v480 = vld [vmem:[%s455 + $0x28] sm:$0xff]
      %v481 = vld [vmem:[%s455 + $0x30] sm:$0xff]
      %v482 = vld [vmem:[%s455 + $0x38] sm:$0xff]
      %v483 = vld [vmem:[%s455 + $0x40] sm:$0xff]
      %v484 = vld [vmem:[%s455 + $0x48] sm:$0xff]
      %v485 = vld [vmem:[%s455 + $0x50] sm:$0xff]
      %v486 = vld [vmem:[%s455 + $0x58] sm:$0xff]
      %v487 = vld [vmem:[%s455 + $0x60] sm:$0xff]
      %v488 = vld [vmem:[%s455 + $0x68] sm:$0xff]
      %v489 = vld [vmem:[%s455 + $0x70] sm:$0xff]
      %v490 = vld [vmem:[%s455 + $0x78] sm:$0xff]
      %v491 = vld [vmem:[%s455 + $0x80] sm:$0xff]
      %v492 = vld [vmem:[%s455 + $0x88] sm:$0xff]
      %v493 = vld [vmem:[%s455 + $0x90] sm:$0xff]
      %v494 = vld [vmem:[%s455 + $0x98] sm:$0xff]
      %v495 = vld [vmem:[%s455 + $0xa0] sm:$0xff]
      %v496 = vld [vmem:[%s455 + $0xa8] sm:$0xff]
      %v497 = vld [vmem:[%s455 + $0xb0] sm:$0xff]
      %v498 = vld [vmem:[%s455 + $0xb8] sm:$0xff]
      %v499 = vld [vmem:[%s455 + $0xc0] sm:$0xff]
      %v500 = vld [vmem:[%s455 + $0xc8] sm:$0xff]
      %v501 = vld [vmem:[%s455 + $0xd0] sm:$0xff]
      %v502 = vld [vmem:[%s455 + $0xd8] sm:$0xff]
      %v503 = vld [vmem:[%s455 + $0xe0] sm:$0xff]
      %v504 = vld [vmem:[%s455 + $0xe8] sm:$0xff]
      %v505 = vld [vmem:[%s455 + $0xf0] sm:$0xff]
      %v506 = vld [vmem:[%s455 + $0xf8] sm:$0xff]
      %v507 = vld [vmem:[%s3] sm:$0xff]
      %v508 = vld [vmem:[%s3 + $0x8] sm:$0xff]
      %v509 = vld [vmem:[%s4] sm:$0x1]
      %v511 = vperm.slane %v509, 0
      %vm513 = vcmask 130048
      %v515 = vsel %vm513, %v475, 0
      %v518 = vsel %vm513, %v476, 0
      %v521 = vsel %vm513, %v477, 0
      %v524 = vsel %vm513, %v478, 0
      %v527 = vsel %vm513, %v479, 0
      %v530 = vsel %vm513, %v480, 0
      %v533 = vsel %vm513, %v481, 0
      %v536 = vsel %vm513, %v482, 0
      %v539 = vsel %vm513, %v483, 0
      %v542 = vsel %vm513, %v484, 0
      %v545 = vsel %vm513, %v485, 0
      %v548 = vsel %vm513, %v486, 0
      %v551 = vsel %vm513, %v487, 0
      %v554 = vsel %vm513, %v488, 0
      %v557 = vsel %vm513, %v489, 0
      %v560 = vsel %vm513, %v490, 0
      %v563 = vsel %vm513, %v491, 0
      %v566 = vsel %vm513, %v492, 0
      %v569 = vsel %vm513, %v493, 0
      %v572 = vsel %vm513, %v494, 0
      %v575 = vsel %vm513, %v495, 0
      %v578 = vsel %vm513, %v496, 0
      %v581 = vsel %vm513, %v497, 0
      %v584 = vsel %vm513, %v498, 0
      %v587 = vsel %vm513, %v499, 0
      %v590 = vsel %vm513, %v500, 0
      %v593 = vsel %vm513, %v501, 0
      %v596 = vsel %vm513, %v502, 0
      %v599 = vsel %vm513, %v503, 0
      %v602 = vsel %vm513, %v504, 0
      %v605 = vsel %vm513, %v505, 0
      %v608 = vsel %vm513, %v506, 0
      %610 = vmatpush.msra.mxu0 0.0
      %611 = vmatpush.msra.mxu0 0.0
      %612 = vmatpush.msra.mxu0 0.0
      %613 = vmatpush.msra.mxu0 0.0
      %614 = vmatpush.msra.mxu0 0.0
      %615 = vmatpush.msra.mxu0 0.0
      %616 = vmatpush.msra.mxu0 0.0
      %617 = vmatpush.msra.mxu0 0.0
      %618 = vmatpush.msra.mxu0 0.0
      %619 = vmatpush.msra.mxu0 0.0
      %620 = vmatpush.msra.mxu0 0.0
      %621 = vmatpush.msra.mxu0 0.0
      %622 = vmatpush.msra.mxu0 0.0
      %623 = vmatpush.msra.mxu0 0.0
      %624 = vmatpush.msra.mxu0 %v508
      %625 = vmatpush.msra.mxu0 %v507
      %626 = vmatmul.f32.gmra.mxu0 %v515
      %v627 = vpop.f32.mrf.mxu0
      %v628 = vadd.f32 %v511, %v627
      %629 = vmatmul.f32.gmra.mxu0 %v518
      %v630 = vpop.f32.mrf.mxu0
      %v631 = vadd.f32 %v511, %v630
      %632 = vmatmul.f32.gmra.mxu0 %v521
      %v633 = vpop.f32.mrf.mxu0
      %v634 = vadd.f32 %v511, %v633
      %635 = vmatmul.f32.gmra.mxu0 %v524
      %v636 = vpop.f32.mrf.mxu0
      %v637 = vadd.f32 %v511, %v636
      %638 = vmatmul.f32.gmra.mxu0 %v527
      %v639 = vpop.f32.mrf.mxu0
      %v640 = vadd.f32 %v511, %v639
      %641 = vmatmul.f32.gmra.mxu0 %v530
      %v642 = vpop.f32.mrf.mxu0
      %v643 = vadd.f32 %v511, %v642
      %644 = vmatmul.f32.gmra.mxu0 %v533
      %v645 = vpop.f32.mrf.mxu0
      %v646 = vadd.f32 %v511, %v645
      %647 = vmatmul.f32.gmra.mxu0 %v536
      %v648 = vpop.f32.mrf.mxu0
      %v649 = vadd.f32 %v511, %v648
      %650 = vmatmul.f32.gmra.mxu0 %v539
      %v651 = vpop.f32.mrf.mxu0
      %v652 = vadd.f32 %v511, %v651
      %653 = vmatmul.f32.gmra.mxu0 %v542
      %v654 = vpop.f32.mrf.mxu0
      %v655 = vadd.f32 %v511, %v654
      %656 = vmatmul.f32.gmra.mxu0 %v545
      %v657 = vpop.f32.mrf.mxu0
      %v658 = vadd.f32 %v511, %v657
      %659 = vmatmul.f32.gmra.mxu0 %v548
      %v660 = vpop.f32.mrf.mxu0
      %v661 = vadd.f32 %v511, %v660
      %662 = vmatmul.f32.gmra.mxu0 %v551
      %v663 = vpop.f32.mrf.mxu0
      %v664 = vadd.f32 %v511, %v663
      %665 = vmatmul.f32.gmra.mxu0 %v554
      %v666 = vpop.f32.mrf.mxu0
      %v667 = vadd.f32 %v511, %v666
      %668 = vmatmul.f32.gmra.mxu0 %v557
      %v669 = vpop.f32.mrf.mxu0
      %v670 = vadd.f32 %v511, %v669
      %671 = vmatmul.f32.gmra.mxu0 %v560
      %v672 = vpop.f32.mrf.mxu0
      %v673 = vadd.f32 %v511, %v672
      %674 = vmatmul.f32.gmra.mxu0 %v563
      %v675 = vpop.f32.mrf.mxu0
      %v676 = vadd.f32 %v511, %v675
      %677 = vmatmul.f32.gmra.mxu0 %v566
      %v678 = vpop.f32.mrf.mxu0
      %v679 = vadd.f32 %v511, %v678
      %680 = vmatmul.f32.gmra.mxu0 %v569
      %v681 = vpop.f32.mrf.mxu0
      %v682 = vadd.f32 %v511, %v681
      %683 = vmatmul.f32.gmra.mxu0 %v572
      %v684 = vpop.f32.mrf.mxu0
      %v685 = vadd.f32 %v511, %v684
      %686 = vmatmul.f32.gmra.mxu0 %v575
      %v687 = vpop.f32.mrf.mxu0
      %v688 = vadd.f32 %v511, %v687
      %689 = vmatmul.f32.gmra.mxu0 %v578
      %v690 = vpop.f32.mrf.mxu0
      %v691 = vadd.f32 %v511, %v690
      %692 = vmatmul.f32.gmra.mxu0 %v581
      %v693 = vpop.f32.mrf.mxu0
      %v694 = vadd.f32 %v511, %v693
      %695 = vmatmul.f32.gmra.mxu0 %v584
      %v696 = vpop.f32.mrf.mxu0
      %v697 = vadd.f32 %v511, %v696
      %698 = vmatmul.f32.gmra.mxu0 %v587
      %v699 = vpop.f32.mrf.mxu0
      %v700 = vadd.f32 %v511, %v699
      %701 = vmatmul.f32.gmra.mxu0 %v590
      %v702 = vpop.f32.mrf.mxu0
      %v703 = vadd.f32 %v511, %v702
      %704 = vmatmul.f32.gmra.mxu0 %v593
      %v705 = vpop.f32.mrf.mxu0
      %v706 = vadd.f32 %v511, %v705
      %707 = vmatmul.f32.gmra.mxu0 %v596
      %v708 = vpop.f32.mrf.mxu0
      %v709 = vadd.f32 %v511, %v708
      %710 = vmatmul.f32.gmra.mxu0 %v599
      %v711 = vpop.f32.mrf.mxu0
      %v712 = vadd.f32 %v511, %v711
      %713 = vmatmul.f32.gmra.mxu0 %v602
      %v714 = vpop.f32.mrf.mxu0
      %v715 = vadd.f32 %v511, %v714
      %716 = vmatmul.f32.gmra.mxu0 %v605
      %v717 = vpop.f32.mrf.mxu0
      %v718 = vadd.f32 %v511, %v717
      %719 = vmatmul.f32.gmra.mxu0 %v608
      %v720 = vpop.f32.mrf.mxu0
      %v721 = vadd.f32 %v511, %v720
      %722 = vdwg.mxu0
      %v723 = vmax.f32 %v628, 0.0
      %v724 = vmax.f32 %v631, 0.0
      %v725 = vmax.f32 %v634, 0.0
      %v726 = vmax.f32 %v637, 0.0
      %v727 = vmax.f32 %v640, 0.0
      %v728 = vmax.f32 %v643, 0.0
      %v729 = vmax.f32 %v646, 0.0
      %v730 = vmax.f32 %v649, 0.0
      %v731 = vmax.f32 %v652, 0.0
      %v732 = vmax.f32 %v655, 0.0
      %v733 = vmax.f32 %v658, 0.0
      %v734 = vmax.f32 %v661, 0.0
      %v735 = vmax.f32 %v664, 0.0
      %v736 = vmax.f32 %v667, 0.0
      %v737 = vmax.f32 %v670, 0.0
      %v738 = vmax.f32 %v673, 0.0
      %v739 = vmax.f32 %v676, 0.0
      %v740 = vmax.f32 %v679, 0.0
      %v741 = vmax.f32 %v682, 0.0
      %v742 = vmax.f32 %v685, 0.0
      %v743 = vmax.f32 %v688, 0.0
      %v744 = vmax.f32 %v691, 0.0
      %v745 = vmax.f32 %v694, 0.0
      %v746 = vmax.f32 %v697, 0.0
      %v747 = vmax.f32 %v700, 0.0
      %v748 = vmax.f32 %v703, 0.0
      %v749 = vmax.f32 %v706, 0.0
      %v750 = vmax.f32 %v709, 0.0
      %v751 = vmax.f32 %v712, 0.0
      %v752 = vmax.f32 %v715, 0.0
      %v753 = vmax.f32 %v718, 0.0
      %v754 = vmax.f32 %v721, 0.0
      %v755 = vld [vmem:[%s5] sm:$0xff]
      %v756 = vld [vmem:[%s5 + $0x8] sm:$0xff]
      %v757 = vld [vmem:[%s5 + $0x10] sm:$0xff]
      %v758 = vld [vmem:[%s5 + $0x18] sm:$0xff]
      %v759 = vld [vmem:[%s6] sm:$0x1]
      %v761 = vperm.slane %v759, 0
      %vm763 = vcmask 261120
      %v765 = vsel %vm763, %v723, 0
      %v768 = vsel %vm763, %v724, 0
      %v771 = vsel %vm763, %v725, 0
      %v774 = vsel %vm763, %v726, 0
      %v777 = vsel %vm763, %v727, 0
      %v780 = vsel %vm763, %v728, 0
      %v783 = vsel %vm763, %v729, 0
      %v786 = vsel %vm763, %v730, 0
      %v789 = vsel %vm763, %v731, 0
      %v792 = vsel %vm763, %v732, 0
      %v795 = vsel %vm763, %v733, 0
      %v798 = vsel %vm763, %v734, 0
      %v801 = vsel %vm763, %v735, 0
      %v804 = vsel %vm763, %v736, 0
      %v807 = vsel %vm763, %v737, 0
      %v810 = vsel %vm763, %v738, 0
      %v813 = vsel %vm763, %v739, 0
      %v816 = vsel %vm763, %v740, 0
      %v819 = vsel %vm763, %v741, 0
      %v822 = vsel %vm763, %v742, 0
      %v825 = vsel %vm763, %v743, 0
      %v828 = vsel %vm763, %v744, 0
      %v831 = vsel %vm763, %v745, 0
      %v834 = vsel %vm763, %v746, 0
      %v837 = vsel %vm763, %v747, 0
      %v840 = vsel %vm763, %v748, 0
      %v843 = vsel %vm763, %v749, 0
      %v846 = vsel %vm763, %v750, 0
      %v849 = vsel %vm763, %v751, 0
      %v852 = vsel %vm763, %v752, 0
      %v855 = vsel %vm763, %v753, 0
      %v858 = vsel %vm763, %v754, 0
      %860 = vmatpush.msra.mxu0 0.0
      %861 = vmatpush.msra.mxu0 0.0
      %862 = vmatpush.msra.mxu0 0.0
      %863 = vmatpush.msra.mxu0 0.0
      %864 = vmatpush.msra.mxu0 0.0
      %865 = vmatpush.msra.mxu0 0.0
      %866 = vmatpush.msra.mxu0 0.0
      %867 = vmatpush.msra.mxu0 0.0
      %868 = vmatpush.msra.mxu0 0.0
      %869 = vmatpush.msra.mxu0 0.0
      %870 = vmatpush.msra.mxu0 0.0
      %871 = vmatpush.msra.mxu0 0.0
      %872 = vmatpush.msra.mxu0 %v758
      %873 = vmatpush.msra.mxu0 %v757
      %874 = vmatpush.msra.mxu0 %v756
      %875 = vmatpush.msra.mxu0 %v755
      %876 = vmatmul.f32.gmra.mxu0 %v765
      %v877 = vpop.f32.mrf.mxu0
      %v878 = vadd.f32 %v761, %v877
      %879 = vmatmul.f32.gmra.mxu0 %v768
      %v880 = vpop.f32.mrf.mxu0
      %v881 = vadd.f32 %v761, %v880
      %882 = vmatmul.f32.gmra.mxu0 %v771
      %v883 = vpop.f32.mrf.mxu0
      %v884 = vadd.f32 %v761, %v883
      %885 = vmatmul.f32.gmra.mxu0 %v774
      %v886 = vpop.f32.mrf.mxu0
      %v887 = vadd.f32 %v761, %v886
      %888 = vmatmul.f32.gmra.mxu0 %v777
      %v889 = vpop.f32.mrf.mxu0
      %v890 = vadd.f32 %v761, %v889
      %891 = vmatmul.f32.gmra.mxu0 %v780
      %v892 = vpop.f32.mrf.mxu0
      %v893 = vadd.f32 %v761, %v892
      %894 = vmatmul.f32.gmra.mxu0 %v783
      %v895 = vpop.f32.mrf.mxu0
      %v896 = vadd.f32 %v761, %v895
      %897 = vmatmul.f32.gmra.mxu0 %v786
      %v898 = vpop.f32.mrf.mxu0
      %v899 = vadd.f32 %v761, %v898
      %900 = vmatmul.f32.gmra.mxu0 %v789
      %v901 = vpop.f32.mrf.mxu0
      %v902 = vadd.f32 %v761, %v901
      %903 = vmatmul.f32.gmra.mxu0 %v792
      %v904 = vpop.f32.mrf.mxu0
      %v905 = vadd.f32 %v761, %v904
      %906 = vmatmul.f32.gmra.mxu0 %v795
      %v907 = vpop.f32.mrf.mxu0
      %v908 = vadd.f32 %v761, %v907
      %909 = vmatmul.f32.gmra.mxu0 %v798
      %v910 = vpop.f32.mrf.mxu0
      %v911 = vadd.f32 %v761, %v910
      %912 = vmatmul.f32.gmra.mxu0 %v801
      %v913 = vpop.f32.mrf.mxu0
      %v914 = vadd.f32 %v761, %v913
      %915 = vmatmul.f32.gmra.mxu0 %v804
      %v916 = vpop.f32.mrf.mxu0
      %v917 = vadd.f32 %v761, %v916
      %918 = vmatmul.f32.gmra.mxu0 %v807
      %v919 = vpop.f32.mrf.mxu0
      %v920 = vadd.f32 %v761, %v919
      %921 = vmatmul.f32.gmra.mxu0 %v810
      %v922 = vpop.f32.mrf.mxu0
      %v923 = vadd.f32 %v761, %v922
      %924 = vmatmul.f32.gmra.mxu0 %v813
      %v925 = vpop.f32.mrf.mxu0
      %v926 = vadd.f32 %v761, %v925
      %927 = vmatmul.f32.gmra.mxu0 %v816
      %v928 = vpop.f32.mrf.mxu0
      %v929 = vadd.f32 %v761, %v928
      %930 = vmatmul.f32.gmra.mxu0 %v819
      %v931 = vpop.f32.mrf.mxu0
      %v932 = vadd.f32 %v761, %v931
      %933 = vmatmul.f32.gmra.mxu0 %v822
      %v934 = vpop.f32.mrf.mxu0
      %v935 = vadd.f32 %v761, %v934
      %936 = vmatmul.f32.gmra.mxu0 %v825
      %v937 = vpop.f32.mrf.mxu0
      %v938 = vadd.f32 %v761, %v937
      %939 = vmatmul.f32.gmra.mxu0 %v828
      %v940 = vpop.f32.mrf.mxu0
      %v941 = vadd.f32 %v761, %v940
      %942 = vmatmul.f32.gmra.mxu0 %v831
      %v943 = vpop.f32.mrf.mxu0
      %v944 = vadd.f32 %v761, %v943
      %945 = vmatmul.f32.gmra.mxu0 %v834
      %v946 = vpop.f32.mrf.mxu0
      %v947 = vadd.f32 %v761, %v946
      %948 = vmatmul.f32.gmra.mxu0 %v837
      %v949 = vpop.f32.mrf.mxu0
      %v950 = vadd.f32 %v761, %v949
      %951 = vmatmul.f32.gmra.mxu0 %v840
      %v952 = vpop.f32.mrf.mxu0
      %v953 = vadd.f32 %v761, %v952
      %954 = vmatmul.f32.gmra.mxu0 %v843
      %v955 = vpop.f32.mrf.mxu0
      %v956 = vadd.f32 %v761, %v955
      %957 = vmatmul.f32.gmra.mxu0 %v846
      %v958 = vpop.f32.mrf.mxu0
      %v959 = vadd.f32 %v761, %v958
      %960 = vmatmul.f32.gmra.mxu0 %v849
      %v961 = vpop.f32.mrf.mxu0
      %v962 = vadd.f32 %v761, %v961
      %963 = vmatmul.f32.gmra.mxu0 %v852
      %v964 = vpop.f32.mrf.mxu0
      %v965 = vadd.f32 %v761, %v964
      %966 = vmatmul.f32.gmra.mxu0 %v855
      %v967 = vpop.f32.mrf.mxu0
      %v968 = vadd.f32 %v761, %v967
      %969 = vmatmul.f32.gmra.mxu0 %v858
      %v970 = vpop.f32.mrf.mxu0
      %v971 = vadd.f32 %v761, %v970
      %972 = vdwg.mxu0
      %v973 = vmax.f32 %v878, 0.0
      %v974 = vmax.f32 %v881, 0.0
      %v975 = vmax.f32 %v884, 0.0
      %v976 = vmax.f32 %v887, 0.0
      %v977 = vmax.f32 %v890, 0.0
      %v978 = vmax.f32 %v893, 0.0
      %v979 = vmax.f32 %v896, 0.0
      %v980 = vmax.f32 %v899, 0.0
      %v981 = vmax.f32 %v902, 0.0
      %v982 = vmax.f32 %v905, 0.0
      %v983 = vmax.f32 %v908, 0.0
      %v984 = vmax.f32 %v911, 0.0
      %v985 = vmax.f32 %v914, 0.0
      %v986 = vmax.f32 %v917, 0.0
      %v987 = vmax.f32 %v920, 0.0
      %v988 = vmax.f32 %v923, 0.0
      %v989 = vmax.f32 %v926, 0.0
      %v990 = vmax.f32 %v929, 0.0
      %v991 = vmax.f32 %v932, 0.0
      %v992 = vmax.f32 %v935, 0.0
      %v993 = vmax.f32 %v938, 0.0
      %v994 = vmax.f32 %v941, 0.0
      %v995 = vmax.f32 %v944, 0.0
      %v996 = vmax.f32 %v947, 0.0
      %v997 = vmax.f32 %v950, 0.0
      %v998 = vmax.f32 %v953, 0.0
      %v999 = vmax.f32 %v956, 0.0
      %v1000 = vmax.f32 %v959, 0.0
      %v1001 = vmax.f32 %v962, 0.0
      %v1002 = vmax.f32 %v965, 0.0
      %v1003 = vmax.f32 %v968, 0.0
      %v1004 = vmax.f32 %v971, 0.0
      %v1005 = vld [vmem:[%s7] sm:$0xff]
      %v1006 = vld [vmem:[%s7 + $0x8] sm:$0xff]
      %v1007 = vld [vmem:[%s7 + $0x10] sm:$0xff]
      %v1008 = vld [vmem:[%s7 + $0x18] sm:$0xff]
      %v1009 = vld [vmem:[%s8] sm:$0x1]
      %v1011 = vperm.slane %v1009, 0
      %v1014 = vsel %vm763, %v973, 0
      %v1017 = vsel %vm763, %v974, 0
      %v1020 = vsel %vm763, %v975, 0
      %v1023 = vsel %vm763, %v976, 0
      %v1026 = vsel %vm763, %v977, 0
      %v1029 = vsel %vm763, %v978, 0
      %v1032 = vsel %vm763, %v979, 0
      %v1035 = vsel %vm763, %v980, 0
      %v1038 = vsel %vm763, %v981, 0
      %v1041 = vsel %vm763, %v982, 0
      %v1044 = vsel %vm763, %v983, 0
      %v1047 = vsel %vm763, %v984, 0
      %v1050 = vsel %vm763, %v985, 0
      %v1053 = vsel %vm763, %v986, 0
      %v1056 = vsel %vm763, %v987, 0
      %v1059 = vsel %vm763, %v988, 0
      %v1062 = vsel %vm763, %v989, 0
      %v1065 = vsel %vm763, %v990, 0
      %v1068 = vsel %vm763, %v991, 0
      %v1071 = vsel %vm763, %v992, 0
      %v1074 = vsel %vm763, %v993, 0
      %v1077 = vsel %vm763, %v994, 0
      %v1080 = vsel %vm763, %v995, 0
      %v1083 = vsel %vm763, %v996, 0
      %v1086 = vsel %vm763, %v997, 0
      %v1089 = vsel %vm763, %v998, 0
      %v1092 = vsel %vm763, %v999, 0
      %v1095 = vsel %vm763, %v1000, 0
      %v1098 = vsel %vm763, %v1001, 0
      %v1101 = vsel %vm763, %v1002, 0
      %v1104 = vsel %vm763, %v1003, 0
      %v1107 = vsel %vm763, %v1004, 0
      %1109 = vmatpush.msra.mxu0 0.0
      %1110 = vmatpush.msra.mxu0 0.0
      %1111 = vmatpush.msra.mxu0 0.0
      %1112 = vmatpush.msra.mxu0 0.0
      %1113 = vmatpush.msra.mxu0 0.0
      %1114 = vmatpush.msra.mxu0 0.0
      %1115 = vmatpush.msra.mxu0 0.0
      %1116 = vmatpush.msra.mxu0 0.0
      %1117 = vmatpush.msra.mxu0 0.0
      %1118 = vmatpush.msra.mxu0 0.0
      %1119 = vmatpush.msra.mxu0 0.0
      %1120 = vmatpush.msra.mxu0 0.0
      %1121 = vmatpush.msra.mxu0 %v1008
      %1122 = vmatpush.msra.mxu0 %v1007
      %1123 = vmatpush.msra.mxu0 %v1006
      %1124 = vmatpush.msra.mxu0 %v1005
      %1125 = vmatmul.f32.gmra.mxu0 %v1014
      %v1126 = vpop.f32.mrf.mxu0
      %v1127 = vadd.f32 %v1011, %v1126
      %1128 = vmatmul.f32.gmra.mxu0 %v1017
      %v1129 = vpop.f32.mrf.mxu0
      %v1130 = vadd.f32 %v1011, %v1129
      %1131 = vmatmul.f32.gmra.mxu0 %v1020
      %v1132 = vpop.f32.mrf.mxu0
      %v1133 = vadd.f32 %v1011, %v1132
      %1134 = vmatmul.f32.gmra.mxu0 %v1023
      %v1135 = vpop.f32.mrf.mxu0
      %v1136 = vadd.f32 %v1011, %v1135
      %1137 = vmatmul.f32.gmra.mxu0 %v1026
      %v1138 = vpop.f32.mrf.mxu0
      %v1139 = vadd.f32 %v1011, %v1138
      %1140 = vmatmul.f32.gmra.mxu0 %v1029
      %v1141 = vpop.f32.mrf.mxu0
      %v1142 = vadd.f32 %v1011, %v1141
      %1143 = vmatmul.f32.gmra.mxu0 %v1032
      %v1144 = vpop.f32.mrf.mxu0
      %v1145 = vadd.f32 %v1011, %v1144
      %1146 = vmatmul.f32.gmra.mxu0 %v1035
      %v1147 = vpop.f32.mrf.mxu0
      %v1148 = vadd.f32 %v1011, %v1147
      %1149 = vmatmul.f32.gmra.mxu0 %v1038
      %v1150 = vpop.f32.mrf.mxu0
      %v1151 = vadd.f32 %v1011, %v1150
      %1152 = vmatmul.f32.gmra.mxu0 %v1041
      %v1153 = vpop.f32.mrf.mxu0
      %v1154 = vadd.f32 %v1011, %v1153
      %1155 = vmatmul.f32.gmra.mxu0 %v1044
      %v1156 = vpop.f32.mrf.mxu0
      %v1157 = vadd.f32 %v1011, %v1156
      %1158 = vmatmul.f32.gmra.mxu0 %v1047
      %v1159 = vpop.f32.mrf.mxu0
      %v1160 = vadd.f32 %v1011, %v1159
      %1161 = vmatmul.f32.gmra.mxu0 %v1050
      %v1162 = vpop.f32.mrf.mxu0
      %v1163 = vadd.f32 %v1011, %v1162
      %1164 = vmatmul.f32.gmra.mxu0 %v1053
      %v1165 = vpop.f32.mrf.mxu0
      %v1166 = vadd.f32 %v1011, %v1165
      %1167 = vmatmul.f32.gmra.mxu0 %v1056
      %v1168 = vpop.f32.mrf.mxu0
      %v1169 = vadd.f32 %v1011, %v1168
      %1170 = vmatmul.f32.gmra.mxu0 %v1059
      %v1171 = vpop.f32.mrf.mxu0
      %v1172 = vadd.f32 %v1011, %v1171
      %1173 = vmatmul.f32.gmra.mxu0 %v1062
      %v1174 = vpop.f32.mrf.mxu0
      %v1175 = vadd.f32 %v1011, %v1174
      %1176 = vmatmul.f32.gmra.mxu0 %v1065
      %v1177 = vpop.f32.mrf.mxu0
      %v1178 = vadd.f32 %v1011, %v1177
      %1179 = vmatmul.f32.gmra.mxu0 %v1068
      %v1180 = vpop.f32.mrf.mxu0
      %v1181 = vadd.f32 %v1011, %v1180
      %1182 = vmatmul.f32.gmra.mxu0 %v1071
      %v1183 = vpop.f32.mrf.mxu0
      %v1184 = vadd.f32 %v1011, %v1183
      %1185 = vmatmul.f32.gmra.mxu0 %v1074
      %v1186 = vpop.f32.mrf.mxu0
      %v1187 = vadd.f32 %v1011, %v1186
      %1188 = vmatmul.f32.gmra.mxu0 %v1077
      %v1189 = vpop.f32.mrf.mxu0
      %v1190 = vadd.f32 %v1011, %v1189
      %1191 = vmatmul.f32.gmra.mxu0 %v1080
      %v1192 = vpop.f32.mrf.mxu0
      %v1193 = vadd.f32 %v1011, %v1192
      %1194 = vmatmul.f32.gmra.mxu0 %v1083
      %v1195 = vpop.f32.mrf.mxu0
      %v1196 = vadd.f32 %v1011, %v1195
      %1197 = vmatmul.f32.gmra.mxu0 %v1086
      %v1198 = vpop.f32.mrf.mxu0
      %v1199 = vadd.f32 %v1011, %v1198
      %1200 = vmatmul.f32.gmra.mxu0 %v1089
      %v1201 = vpop.f32.mrf.mxu0
      %v1202 = vadd.f32 %v1011, %v1201
      %1203 = vmatmul.f32.gmra.mxu0 %v1092
      %v1204 = vpop.f32.mrf.mxu0
      %v1205 = vadd.f32 %v1011, %v1204
      %1206 = vmatmul.f32.gmra.mxu0 %v1095
      %v1207 = vpop.f32.mrf.mxu0
      %v1208 = vadd.f32 %v1011, %v1207
      %1209 = vmatmul.f32.gmra.mxu0 %v1098
      %v1210 = vpop.f32.mrf.mxu0
      %v1211 = vadd.f32 %v1011, %v1210
      %1212 = vmatmul.f32.gmra.mxu0 %v1101
      %v1213 = vpop.f32.mrf.mxu0
      %v1214 = vadd.f32 %v1011, %v1213
      %1215 = vmatmul.f32.gmra.mxu0 %v1104
      %v1216 = vpop.f32.mrf.mxu0
      %v1217 = vadd.f32 %v1011, %v1216
      %1218 = vmatmul.f32.gmra.mxu0 %v1107
      %v1219 = vpop.f32.mrf.mxu0
      %v1220 = vadd.f32 %v1011, %v1219
      %1221 = vdwg.mxu0
      %v1222 = vld [vmem:[%s461] sm:$0xff]
      %v1223 = vld [vmem:[%s461 + $0x8] sm:$0xff]
      %v1224 = vld [vmem:[%s461 + $0x10] sm:$0xff]
      %v1225 = vld [vmem:[%s461 + $0x18] sm:$0xff]
      %v1226 = vld [vmem:[%s9] sm:$0xff]
      %v1227 = vld [vmem:[%s9 + $0x8] sm:$0xff]
      %v1228 = vld [vmem:[%s10] sm:$0x1]
      %v1230 = vperm.slane %v1228, 0
      %v1233 = vsel %vm513, %v1222, 0
      %v1236 = vsel %vm513, %v1223, 0
      %v1239 = vsel %vm513, %v1224, 0
      %v1242 = vsel %vm513, %v1225, 0
      %1244 = vmatpush.msra.mxu0 0.0
      %1245 = vmatpush.msra.mxu0 0.0
      %1246 = vmatpush.msra.mxu0 0.0
      %1247 = vmatpush.msra.mxu0 0.0
      %1248 = vmatpush.msra.mxu0 0.0
      %1249 = vmatpush.msra.mxu0 0.0
      %1250 = vmatpush.msra.mxu0 0.0
      %1251 = vmatpush.msra.mxu0 0.0
      %1252 = vmatpush.msra.mxu0 0.0
      %1253 = vmatpush.msra.mxu0 0.0
      %1254 = vmatpush.msra.mxu0 0.0
      %1255 = vmatpush.msra.mxu0 0.0
      %1256 = vmatpush.msra.mxu0 0.0
      %1257 = vmatpush.msra.mxu0 0.0
      %1258 = vmatpush.msra.mxu0 %v1227
      %1259 = vmatpush.msra.mxu0 %v1226
      %1260 = vmatmul.f32.gmra.mxu0 %v1233
      %v1261 = vpop.f32.mrf.mxu0
      %v1262 = vadd.f32 %v1230, %v1261
      %1263 = vmatmul.f32.gmra.mxu0 %v1236
      %v1264 = vpop.f32.mrf.mxu0
      %v1265 = vadd.f32 %v1230, %v1264
      %1266 = vmatmul.f32.gmra.mxu0 %v1239
      %v1267 = vpop.f32.mrf.mxu0
      %v1268 = vadd.f32 %v1230, %v1267
      %1269 = vmatmul.f32.gmra.mxu0 %v1242
      %v1270 = vpop.f32.mrf.mxu0
      %v1271 = vadd.f32 %v1230, %v1270
      %1272 = vdwg.mxu0
      %v1273 = vmul.f32 %v1262, 0.17677669
      %v1274 = vmul.f32 %v1265, 0.17677669
      %v1275 = vmul.f32 %v1268, 0.17677669
      %v1276 = vmul.f32 %v1271, 0.17677669
      %v1281 = vrot.slane %v1273, 1
      %v1282 = vrot.slane %v1273, 2
      %v1283 = vrot.slane %v1273, 3
      %v1284 = vrot.slane %v1273, 4
      %v1285 = vrot.slane %v1273, 5
      %v1286 = vrot.slane %v1273, 6
      %v1287 = vrot.slane %v1273, 7
      %v1288 = vrot.slane %v1274, 1
      %v1289 = vrot.slane %v1274, 2
      %v1290 = vrot.slane %v1274, 3
      %v1291 = vrot.slane %v1274, 4
      %v1292 = vrot.slane %v1274, 5
      %v1293 = vrot.slane %v1274, 6
      %v1294 = vrot.slane %v1274, 7
      %v1295 = vrot.slane %v1275, 1
      %v1296 = vrot.slane %v1275, 2
      %v1297 = vrot.slane %v1275, 3
      %v1298 = vrot.slane %v1275, 4
      %v1299 = vrot.slane %v1275, 5
      %v1300 = vrot.slane %v1275, 6
      %v1301 = vrot.slane %v1275, 7
      %v1302 = vrot.slane %v1276, 1
      %v1303 = vrot.slane %v1276, 2
      %v1304 = vrot.slane %v1276, 3
      %v1305 = vrot.slane %v1276, 4
      %v1306 = vrot.slane %v1276, 5
      %v1307 = vrot.slane %v1276, 6
      %v1308 = vrot.slane %v1276, 7
      %v1309 = vsel %vm763, %v1273, 0
      %v1312 = vsel %vm763, %v1127, 0
      %1314 = vmatpush.xpose.msra.mxu0 0.0
      %1315 = vmatpush.xpose.msra.mxu0 0.0
      %1316 = vmatpush.xpose.msra.mxu0 0.0
      %1317 = vmatpush.xpose.msra.mxu0 0.0
      %1318 = vmatpush.xpose.msra.mxu0 0.0
      %1319 = vmatpush.xpose.msra.mxu0 0.0
      %1320 = vmatpush.xpose.msra.mxu0 0.0
      %1321 = vmatpush.xpose.msra.mxu0 0.0
      %1322 = vmatpush.xpose.msra.mxu0 0.0
      %1323 = vmatpush.xpose.msra.mxu0 0.0
      %1324 = vmatpush.xpose.msra.mxu0 0.0
      %1325 = vmatpush.xpose.msra.mxu0 0.0
      %1326 = vmatpush.xpose.msra.mxu0 0.0
      %1327 = vmatpush.xpose.msra.mxu0 0.0
      %1328 = vmatpush.xpose.msra.mxu0 0.0
      %1329 = vmatpush.xpose.msra.mxu0 %v1312
      %1330 = vmatmul.f32.gmra.mxu0 %v1309
      %v1331 = vpop.f32.mrf.mxu0
      %v1332 = vadd.f32 0.0, %v1331
      %1333 = vdwg.mxu0
      %v1334 = vsel %vm763, %v1281, 0
      %v1337 = vsel %vm763, %v1130, 0
      %1339 = vmatpush.xpose.msra.mxu0 0.0
      %1340 = vmatpush.xpose.msra.mxu0 0.0
      %1341 = vmatpush.xpose.msra.mxu0 0.0
      %1342 = vmatpush.xpose.msra.mxu0 0.0
      %1343 = vmatpush.xpose.msra.mxu0 0.0
      %1344 = vmatpush.xpose.msra.mxu0 0.0
      %1345 = vmatpush.xpose.msra.mxu0 0.0
      %1346 = vmatpush.xpose.msra.mxu0 0.0
      %1347 = vmatpush.xpose.msra.mxu0 0.0
      %1348 = vmatpush.xpose.msra.mxu0 0.0
      %1349 = vmatpush.xpose.msra.mxu0 0.0
      %1350 = vmatpush.xpose.msra.mxu0 0.0
      %1351 = vmatpush.xpose.msra.mxu0 0.0
      %1352 = vmatpush.xpose.msra.mxu0 0.0
      %1353 = vmatpush.xpose.msra.mxu0 0.0
      %1354 = vmatpush.xpose.msra.mxu0 %v1337
      %1355 = vmatmul.f32.gmra.mxu0 %v1334
      %v1356 = vpop.f32.mrf.mxu0
      %v1357 = vadd.f32 0.0, %v1356
      %1358 = vdwg.mxu0
      %v1359 = vsel %vm763, %v1282, 0
      %v1362 = vsel %vm763, %v1133, 0
      %1364 = vmatpush.xpose.msra.mxu0 0.0
      %1365 = vmatpush.xpose.msra.mxu0 0.0
      %1366 = vmatpush.xpose.msra.mxu0 0.0
      %1367 = vmatpush.xpose.msra.mxu0 0.0
      %1368 = vmatpush.xpose.msra.mxu0 0.0
      %1369 = vmatpush.xpose.msra.mxu0 0.0
      %1370 = vmatpush.xpose.msra.mxu0 0.0
      %1371 = vmatpush.xpose.msra.mxu0 0.0
      %1372 = vmatpush.xpose.msra.mxu0 0.0
      %1373 = vmatpush.xpose.msra.mxu0 0.0
      %1374 = vmatpush.xpose.msra.mxu0 0.0
      %1375 = vmatpush.xpose.msra.mxu0 0.0
      %1376 = vmatpush.xpose.msra.mxu0 0.0
      %1377 = vmatpush.xpose.msra.mxu0 0.0
      %1378 = vmatpush.xpose.msra.mxu0 0.0
      %1379 = vmatpush.xpose.msra.mxu0 %v1362
      %1380 = vmatmul.f32.gmra.mxu0 %v1359
      %v1381 = vpop.f32.mrf.mxu0
      %v1382 = vadd.f32 0.0, %v1381
      %1383 = vdwg.mxu0
      %v1384 = vsel %vm763, %v1283, 0
      %v1387 = vsel %vm763, %v1136, 0
      %1389 = vmatpush.xpose.msra.mxu0 0.0
      %1390 = vmatpush.xpose.msra.mxu0 0.0
      %1391 = vmatpush.xpose.msra.mxu0 0.0
      %1392 = vmatpush.xpose.msra.mxu0 0.0
      %1393 = vmatpush.xpose.msra.mxu0 0.0
      %1394 = vmatpush.xpose.msra.mxu0 0.0
      %1395 = vmatpush.xpose.msra.mxu0 0.0
      %1396 = vmatpush.xpose.msra.mxu0 0.0
      %1397 = vmatpush.xpose.msra.mxu0 0.0
      %1398 = vmatpush.xpose.msra.mxu0 0.0
      %1399 = vmatpush.xpose.msra.mxu0 0.0
      %1400 = vmatpush.xpose.msra.mxu0 0.0
      %1401 = vmatpush.xpose.msra.mxu0 0.0
      %1402 = vmatpush.xpose.msra.mxu0 0.0
      %1403 = vmatpush.xpose.msra.mxu0 0.0
      %1404 = vmatpush.xpose.msra.mxu0 %v1387
      %1405 = vmatmul.f32.gmra.mxu0 %v1384
      %v1406 = vpop.f32.mrf.mxu0
      %v1407 = vadd.f32 0.0, %v1406
      %1408 = vdwg.mxu0
      %v1409 = vsel %vm763, %v1284, 0
      %v1412 = vsel %vm763, %v1139, 0
      %1414 = vmatpush.xpose.msra.mxu0 0.0
      %1415 = vmatpush.xpose.msra.mxu0 0.0
      %1416 = vmatpush.xpose.msra.mxu0 0.0
      %1417 = vmatpush.xpose.msra.mxu0 0.0
      %1418 = vmatpush.xpose.msra.mxu0 0.0
      %1419 = vmatpush.xpose.msra.mxu0 0.0
      %1420 = vmatpush.xpose.msra.mxu0 0.0
      %1421 = vmatpush.xpose.msra.mxu0 0.0
      %1422 = vmatpush.xpose.msra.mxu0 0.0
      %1423 = vmatpush.xpose.msra.mxu0 0.0
      %1424 = vmatpush.xpose.msra.mxu0 0.0
      %1425 = vmatpush.xpose.msra.mxu0 0.0
      %1426 = vmatpush.xpose.msra.mxu0 0.0
      %1427 = vmatpush.xpose.msra.mxu0 0.0
      %1428 = vmatpush.xpose.msra.mxu0 0.0
      %1429 = vmatpush.xpose.msra.mxu0 %v1412
      %1430 = vmatmul.f32.gmra.mxu0 %v1409
      %v1431 = vpop.f32.mrf.mxu0
      %v1432 = vadd.f32 0.0, %v1431
      %1433 = vdwg.mxu0
      %v1434 = vsel %vm763, %v1285, 0
      %v1437 = vsel %vm763, %v1142, 0
      %1439 = vmatpush.xpose.msra.mxu0 0.0
      %1440 = vmatpush.xpose.msra.mxu0 0.0
      %1441 = vmatpush.xpose.msra.mxu0 0.0
      %1442 = vmatpush.xpose.msra.mxu0 0.0
      %1443 = vmatpush.xpose.msra.mxu0 0.0
      %1444 = vmatpush.xpose.msra.mxu0 0.0
      %1445 = vmatpush.xpose.msra.mxu0 0.0
      %1446 = vmatpush.xpose.msra.mxu0 0.0
      %1447 = vmatpush.xpose.msra.mxu0 0.0
      %1448 = vmatpush.xpose.msra.mxu0 0.0
      %1449 = vmatpush.xpose.msra.mxu0 0.0
      %1450 = vmatpush.xpose.msra.mxu0 0.0
      %1451 = vmatpush.xpose.msra.mxu0 0.0
      %1452 = vmatpush.xpose.msra.mxu0 0.0
      %1453 = vmatpush.xpose.msra.mxu0 0.0
      %1454 = vmatpush.xpose.msra.mxu0 %v1437
      %1455 = vmatmul.f32.gmra.mxu0 %v1434
      %v1456 = vpop.f32.mrf.mxu0
      %v1457 = vadd.f32 0.0, %v1456
      %1458 = vdwg.mxu0
      %v1459 = vsel %vm763, %v1286, 0
      %v1462 = vsel %vm763, %v1145, 0
      %1464 = vmatpush.xpose.msra.mxu0 0.0
      %1465 = vmatpush.xpose.msra.mxu0 0.0
      %1466 = vmatpush.xpose.msra.mxu0 0.0
      %1467 = vmatpush.xpose.msra.mxu0 0.0
      %1468 = vmatpush.xpose.msra.mxu0 0.0
      %1469 = vmatpush.xpose.msra.mxu0 0.0
      %1470 = vmatpush.xpose.msra.mxu0 0.0
      %1471 = vmatpush.xpose.msra.mxu0 0.0
      %1472 = vmatpush.xpose.msra.mxu0 0.0
      %1473 = vmatpush.xpose.msra.mxu0 0.0
      %1474 = vmatpush.xpose.msra.mxu0 0.0
      %1475 = vmatpush.xpose.msra.mxu0 0.0
      %1476 = vmatpush.xpose.msra.mxu0 0.0
      %1477 = vmatpush.xpose.msra.mxu0 0.0
      %1478 = vmatpush.xpose.msra.mxu0 0.0
      %1479 = vmatpush.xpose.msra.mxu0 %v1462
      %1480 = vmatmul.f32.gmra.mxu0 %v1459
      %v1481 = vpop.f32.mrf.mxu0
      %v1482 = vadd.f32 0.0, %v1481
      %1483 = vdwg.mxu0
      %v1484 = vsel %vm763, %v1287, 0
      %v1487 = vsel %vm763, %v1148, 0
      %1489 = vmatpush.xpose.msra.mxu0 0.0
      %1490 = vmatpush.xpose.msra.mxu0 0.0
      %1491 = vmatpush.xpose.msra.mxu0 0.0
      %1492 = vmatpush.xpose.msra.mxu0 0.0
      %1493 = vmatpush.xpose.msra.mxu0 0.0
      %1494 = vmatpush.xpose.msra.mxu0 0.0
      %1495 = vmatpush.xpose.msra.mxu0 0.0
      %1496 = vmatpush.xpose.msra.mxu0 0.0
      %1497 = vmatpush.xpose.msra.mxu0 0.0
      %1498 = vmatpush.xpose.msra.mxu0 0.0
      %1499 = vmatpush.xpose.msra.mxu0 0.0
      %1500 = vmatpush.xpose.msra.mxu0 0.0
      %1501 = vmatpush.xpose.msra.mxu0 0.0
      %1502 = vmatpush.xpose.msra.mxu0 0.0
      %1503 = vmatpush.xpose.msra.mxu0 0.0
      %1504 = vmatpush.xpose.msra.mxu0 %v1487
      %1505 = vmatmul.f32.gmra.mxu0 %v1484
      %v1506 = vpop.f32.mrf.mxu0
      %v1507 = vadd.f32 0.0, %v1506
      %1508 = vdwg.mxu0
      %v1509 = vsel %vm763, %v1274, 0
      %v1512 = vsel %vm763, %v1151, 0
      %1514 = vmatpush.xpose.msra.mxu0 0.0
      %1515 = vmatpush.xpose.msra.mxu0 0.0
      %1516 = vmatpush.xpose.msra.mxu0 0.0
      %1517 = vmatpush.xpose.msra.mxu0 0.0
      %1518 = vmatpush.xpose.msra.mxu0 0.0
      %1519 = vmatpush.xpose.msra.mxu0 0.0
      %1520 = vmatpush.xpose.msra.mxu0 0.0
      %1521 = vmatpush.xpose.msra.mxu0 0.0
      %1522 = vmatpush.xpose.msra.mxu0 0.0
      %1523 = vmatpush.xpose.msra.mxu0 0.0
      %1524 = vmatpush.xpose.msra.mxu0 0.0
      %1525 = vmatpush.xpose.msra.mxu0 0.0
      %1526 = vmatpush.xpose.msra.mxu0 0.0
      %1527 = vmatpush.xpose.msra.mxu0 0.0
      %1528 = vmatpush.xpose.msra.mxu0 0.0
      %1529 = vmatpush.xpose.msra.mxu0 %v1512
      %1530 = vmatmul.f32.gmra.mxu0 %v1509
      %v1531 = vpop.f32.mrf.mxu0
      %v1532 = vadd.f32 0.0, %v1531
      %1533 = vdwg.mxu0
      %v1534 = vsel %vm763, %v1288, 0
      %v1537 = vsel %vm763, %v1154, 0
      %1539 = vmatpush.xpose.msra.mxu0 0.0
      %1540 = vmatpush.xpose.msra.mxu0 0.0
      %1541 = vmatpush.xpose.msra.mxu0 0.0
      %1542 = vmatpush.xpose.msra.mxu0 0.0
      %1543 = vmatpush.xpose.msra.mxu0 0.0
      %1544 = vmatpush.xpose.msra.mxu0 0.0
      %1545 = vmatpush.xpose.msra.mxu0 0.0
      %1546 = vmatpush.xpose.msra.mxu0 0.0
      %1547 = vmatpush.xpose.msra.mxu0 0.0
      %1548 = vmatpush.xpose.msra.mxu0 0.0
      %1549 = vmatpush.xpose.msra.mxu0 0.0
      %1550 = vmatpush.xpose.msra.mxu0 0.0
      %1551 = vmatpush.xpose.msra.mxu0 0.0
      %1552 = vmatpush.xpose.msra.mxu0 0.0
      %1553 = vmatpush.xpose.msra.mxu0 0.0
      %1554 = vmatpush.xpose.msra.mxu0 %v1537
      %1555 = vmatmul.f32.gmra.mxu0 %v1534
      %v1556 = vpop.f32.mrf.mxu0
      %v1557 = vadd.f32 0.0, %v1556
      %1558 = vdwg.mxu0
      %v1559 = vsel %vm763, %v1289, 0
      %v1562 = vsel %vm763, %v1157, 0
      %1564 = vmatpush.xpose.msra.mxu0 0.0
      %1565 = vmatpush.xpose.msra.mxu0 0.0
      %1566 = vmatpush.xpose.msra.mxu0 0.0
      %1567 = vmatpush.xpose.msra.mxu0 0.0
      %1568 = vmatpush.xpose.msra.mxu0 0.0
      %1569 = vmatpush.xpose.msra.mxu0 0.0
      %1570 = vmatpush.xpose.msra.mxu0 0.0
      %1571 = vmatpush.xpose.msra.mxu0 0.0
      %1572 = vmatpush.xpose.msra.mxu0 0.0
      %1573 = vmatpush.xpose.msra.mxu0 0.0
      %1574 = vmatpush.xpose.msra.mxu0 0.0
      %1575 = vmatpush.xpose.msra.mxu0 0.0
      %1576 = vmatpush.xpose.msra.mxu0 0.0
      %1577 = vmatpush.xpose.msra.mxu0 0.0
      %1578 = vmatpush.xpose.msra.mxu0 0.0
      %1579 = vmatpush.xpose.msra.mxu0 %v1562
      %1580 = vmatmul.f32.gmra.mxu0 %v1559
      %v1581 = vpop.f32.mrf.mxu0
      %v1582 = vadd.f32 0.0, %v1581
      %1583 = vdwg.mxu0
      %v1584 = vsel %vm763, %v1290, 0
      %v1587 = vsel %vm763, %v1160, 0
      %1589 = vmatpush.xpose.msra.mxu0 0.0
      %1590 = vmatpush.xpose.msra.mxu0 0.0
      %1591 = vmatpush.xpose.msra.mxu0 0.0
      %1592 = vmatpush.xpose.msra.mxu0 0.0
      %1593 = vmatpush.xpose.msra.mxu0 0.0
      %1594 = vmatpush.xpose.msra.mxu0 0.0
      %1595 = vmatpush.xpose.msra.mxu0 0.0
      %1596 = vmatpush.xpose.msra.mxu0 0.0
      %1597 = vmatpush.xpose.msra.mxu0 0.0
      %1598 = vmatpush.xpose.msra.mxu0 0.0
      %1599 = vmatpush.xpose.msra.mxu0 0.0
      %1600 = vmatpush.xpose.msra.mxu0 0.0
      %1601 = vmatpush.xpose.msra.mxu0 0.0
      %1602 = vmatpush.xpose.msra.mxu0 0.0
      %1603 = vmatpush.xpose.msra.mxu0 0.0
      %1604 = vmatpush.xpose.msra.mxu0 %v1587
      %1605 = vmatmul.f32.gmra.mxu0 %v1584
      %v1606 = vpop.f32.mrf.mxu0
      %v1607 = vadd.f32 0.0, %v1606
      %1608 = vdwg.mxu0
      %v1609 = vsel %vm763, %v1291, 0
      %v1612 = vsel %vm763, %v1163, 0
      %1614 = vmatpush.xpose.msra.mxu0 0.0
      %1615 = vmatpush.xpose.msra.mxu0 0.0
      %1616 = vmatpush.xpose.msra.mxu0 0.0
      %1617 = vmatpush.xpose.msra.mxu0 0.0
      %1618 = vmatpush.xpose.msra.mxu0 0.0
      %1619 = vmatpush.xpose.msra.mxu0 0.0
      %1620 = vmatpush.xpose.msra.mxu0 0.0
      %1621 = vmatpush.xpose.msra.mxu0 0.0
      %1622 = vmatpush.xpose.msra.mxu0 0.0
      %1623 = vmatpush.xpose.msra.mxu0 0.0
      %1624 = vmatpush.xpose.msra.mxu0 0.0
      %1625 = vmatpush.xpose.msra.mxu0 0.0
      %1626 = vmatpush.xpose.msra.mxu0 0.0
      %1627 = vmatpush.xpose.msra.mxu0 0.0
      %1628 = vmatpush.xpose.msra.mxu0 0.0
      %1629 = vmatpush.xpose.msra.mxu0 %v1612
      %1630 = vmatmul.f32.gmra.mxu0 %v1609
      %v1631 = vpop.f32.mrf.mxu0
      %v1632 = vadd.f32 0.0, %v1631
      %1633 = vdwg.mxu0
      %v1634 = vsel %vm763, %v1292, 0
      %v1637 = vsel %vm763, %v1166, 0
      %1639 = vmatpush.xpose.msra.mxu0 0.0
      %1640 = vmatpush.xpose.msra.mxu0 0.0
      %1641 = vmatpush.xpose.msra.mxu0 0.0
      %1642 = vmatpush.xpose.msra.mxu0 0.0
      %1643 = vmatpush.xpose.msra.mxu0 0.0
      %1644 = vmatpush.xpose.msra.mxu0 0.0
      %1645 = vmatpush.xpose.msra.mxu0 0.0
      %1646 = vmatpush.xpose.msra.mxu0 0.0
      %1647 = vmatpush.xpose.msra.mxu0 0.0
      %1648 = vmatpush.xpose.msra.mxu0 0.0
      %1649 = vmatpush.xpose.msra.mxu0 0.0
      %1650 = vmatpush.xpose.msra.mxu0 0.0
      %1651 = vmatpush.xpose.msra.mxu0 0.0
      %1652 = vmatpush.xpose.msra.mxu0 0.0
      %1653 = vmatpush.xpose.msra.mxu0 0.0
      %1654 = vmatpush.xpose.msra.mxu0 %v1637
      %1655 = vmatmul.f32.gmra.mxu0 %v1634
      %v1656 = vpop.f32.mrf.mxu0
      %v1657 = vadd.f32 0.0, %v1656
      %1658 = vdwg.mxu0
      %v1659 = vsel %vm763, %v1293, 0
      %v1662 = vsel %vm763, %v1169, 0
      %1664 = vmatpush.xpose.msra.mxu0 0.0
      %1665 = vmatpush.xpose.msra.mxu0 0.0
      %1666 = vmatpush.xpose.msra.mxu0 0.0
      %1667 = vmatpush.xpose.msra.mxu0 0.0
      %1668 = vmatpush.xpose.msra.mxu0 0.0
      %1669 = vmatpush.xpose.msra.mxu0 0.0
      %1670 = vmatpush.xpose.msra.mxu0 0.0
      %1671 = vmatpush.xpose.msra.mxu0 0.0
      %1672 = vmatpush.xpose.msra.mxu0 0.0
      %1673 = vmatpush.xpose.msra.mxu0 0.0
      %1674 = vmatpush.xpose.msra.mxu0 0.0
      %1675 = vmatpush.xpose.msra.mxu0 0.0
      %1676 = vmatpush.xpose.msra.mxu0 0.0
      %1677 = vmatpush.xpose.msra.mxu0 0.0
      %1678 = vmatpush.xpose.msra.mxu0 0.0
      %1679 = vmatpush.xpose.msra.mxu0 %v1662
      %1680 = vmatmul.f32.gmra.mxu0 %v1659
      %v1681 = vpop.f32.mrf.mxu0
      %v1682 = vadd.f32 0.0, %v1681
      %1683 = vdwg.mxu0
      %v1684 = vsel %vm763, %v1294, 0
      %v1687 = vsel %vm763, %v1172, 0
      %1689 = vmatpush.xpose.msra.mxu0 0.0
      %1690 = vmatpush.xpose.msra.mxu0 0.0
      %1691 = vmatpush.xpose.msra.mxu0 0.0
      %1692 = vmatpush.xpose.msra.mxu0 0.0
      %1693 = vmatpush.xpose.msra.mxu0 0.0
      %1694 = vmatpush.xpose.msra.mxu0 0.0
      %1695 = vmatpush.xpose.msra.mxu0 0.0
      %1696 = vmatpush.xpose.msra.mxu0 0.0
      %1697 = vmatpush.xpose.msra.mxu0 0.0
      %1698 = vmatpush.xpose.msra.mxu0 0.0
      %1699 = vmatpush.xpose.msra.mxu0 0.0
      %1700 = vmatpush.xpose.msra.mxu0 0.0
      %1701 = vmatpush.xpose.msra.mxu0 0.0
      %1702 = vmatpush.xpose.msra.mxu0 0.0
      %1703 = vmatpush.xpose.msra.mxu0 0.0
      %1704 = vmatpush.xpose.msra.mxu0 %v1687
      %1705 = vmatmul.f32.gmra.mxu0 %v1684
      %v1706 = vpop.f32.mrf.mxu0
      %v1707 = vadd.f32 0.0, %v1706
      %1708 = vdwg.mxu0
      %v1709 = vsel %vm763, %v1275, 0
      %v1712 = vsel %vm763, %v1175, 0
      %1714 = vmatpush.xpose.msra.mxu0 0.0
      %1715 = vmatpush.xpose.msra.mxu0 0.0
      %1716 = vmatpush.xpose.msra.mxu0 0.0
      %1717 = vmatpush.xpose.msra.mxu0 0.0
      %1718 = vmatpush.xpose.msra.mxu0 0.0
      %1719 = vmatpush.xpose.msra.mxu0 0.0
      %1720 = vmatpush.xpose.msra.mxu0 0.0
      %1721 = vmatpush.xpose.msra.mxu0 0.0
      %1722 = vmatpush.xpose.msra.mxu0 0.0
      %1723 = vmatpush.xpose.msra.mxu0 0.0
      %1724 = vmatpush.xpose.msra.mxu0 0.0
      %1725 = vmatpush.xpose.msra.mxu0 0.0
      %1726 = vmatpush.xpose.msra.mxu0 0.0
      %1727 = vmatpush.xpose.msra.mxu0 0.0
      %1728 = vmatpush.xpose.msra.mxu0 0.0
      %1729 = vmatpush.xpose.msra.mxu0 %v1712
      %1730 = vmatmul.f32.gmra.mxu0 %v1709
      %v1731 = vpop.f32.mrf.mxu0
      %v1732 = vadd.f32 0.0, %v1731
      %1733 = vdwg.mxu0
      %v1734 = vsel %vm763, %v1295, 0
      %v1737 = vsel %vm763, %v1178, 0
      %1739 = vmatpush.xpose.msra.mxu0 0.0
      %1740 = vmatpush.xpose.msra.mxu0 0.0
      %1741 = vmatpush.xpose.msra.mxu0 0.0
      %1742 = vmatpush.xpose.msra.mxu0 0.0
      %1743 = vmatpush.xpose.msra.mxu0 0.0
      %1744 = vmatpush.xpose.msra.mxu0 0.0
      %1745 = vmatpush.xpose.msra.mxu0 0.0
      %1746 = vmatpush.xpose.msra.mxu0 0.0
      %1747 = vmatpush.xpose.msra.mxu0 0.0
      %1748 = vmatpush.xpose.msra.mxu0 0.0
      %1749 = vmatpush.xpose.msra.mxu0 0.0
      %1750 = vmatpush.xpose.msra.mxu0 0.0
      %1751 = vmatpush.xpose.msra.mxu0 0.0
      %1752 = vmatpush.xpose.msra.mxu0 0.0
      %1753 = vmatpush.xpose.msra.mxu0 0.0
      %1754 = vmatpush.xpose.msra.mxu0 %v1737
      %1755 = vmatmul.f32.gmra.mxu0 %v1734
      %v1756 = vpop.f32.mrf.mxu0
      %v1757 = vadd.f32 0.0, %v1756
      %1758 = vdwg.mxu0
      %v1759 = vsel %vm763, %v1296, 0
      %v1762 = vsel %vm763, %v1181, 0
      %1764 = vmatpush.xpose.msra.mxu0 0.0
      %1765 = vmatpush.xpose.msra.mxu0 0.0
      %1766 = vmatpush.xpose.msra.mxu0 0.0
      %1767 = vmatpush.xpose.msra.mxu0 0.0
      %1768 = vmatpush.xpose.msra.mxu0 0.0
      %1769 = vmatpush.xpose.msra.mxu0 0.0
      %1770 = vmatpush.xpose.msra.mxu0 0.0
      %1771 = vmatpush.xpose.msra.mxu0 0.0
      %1772 = vmatpush.xpose.msra.mxu0 0.0
      %1773 = vmatpush.xpose.msra.mxu0 0.0
      %1774 = vmatpush.xpose.msra.mxu0 0.0
      %1775 = vmatpush.xpose.msra.mxu0 0.0
      %1776 = vmatpush.xpose.msra.mxu0 0.0
      %1777 = vmatpush.xpose.msra.mxu0 0.0
      %1778 = vmatpush.xpose.msra.mxu0 0.0
      %1779 = vmatpush.xpose.msra.mxu0 %v1762
      %1780 = vmatmul.f32.gmra.mxu0 %v1759
      %v1781 = vpop.f32.mrf.mxu0
      %v1782 = vadd.f32 0.0, %v1781
      %1783 = vdwg.mxu0
      %v1784 = vsel %vm763, %v1297, 0
      %v1787 = vsel %vm763, %v1184, 0
      %1789 = vmatpush.xpose.msra.mxu0 0.0
      %1790 = vmatpush.xpose.msra.mxu0 0.0
      %1791 = vmatpush.xpose.msra.mxu0 0.0
      %1792 = vmatpush.xpose.msra.mxu0 0.0
      %1793 = vmatpush.xpose.msra.mxu0 0.0
      %1794 = vmatpush.xpose.msra.mxu0 0.0
      %1795 = vmatpush.xpose.msra.mxu0 0.0
      %1796 = vmatpush.xpose.msra.mxu0 0.0
      %1797 = vmatpush.xpose.msra.mxu0 0.0
      %1798 = vmatpush.xpose.msra.mxu0 0.0
      %1799 = vmatpush.xpose.msra.mxu0 0.0
      %1800 = vmatpush.xpose.msra.mxu0 0.0
      %1801 = vmatpush.xpose.msra.mxu0 0.0
      %1802 = vmatpush.xpose.msra.mxu0 0.0
      %1803 = vmatpush.xpose.msra.mxu0 0.0
      %1804 = vmatpush.xpose.msra.mxu0 %v1787
      %1805 = vmatmul.f32.gmra.mxu0 %v1784
      %v1806 = vpop.f32.mrf.mxu0
      %v1807 = vadd.f32 0.0, %v1806
      %1808 = vdwg.mxu0
      %v1809 = vsel %vm763, %v1298, 0
      %v1812 = vsel %vm763, %v1187, 0
      %1814 = vmatpush.xpose.msra.mxu0 0.0
      %1815 = vmatpush.xpose.msra.mxu0 0.0
      %1816 = vmatpush.xpose.msra.mxu0 0.0
      %1817 = vmatpush.xpose.msra.mxu0 0.0
      %1818 = vmatpush.xpose.msra.mxu0 0.0
      %1819 = vmatpush.xpose.msra.mxu0 0.0
      %1820 = vmatpush.xpose.msra.mxu0 0.0
      %1821 = vmatpush.xpose.msra.mxu0 0.0
      %1822 = vmatpush.xpose.msra.mxu0 0.0
      %1823 = vmatpush.xpose.msra.mxu0 0.0
      %1824 = vmatpush.xpose.msra.mxu0 0.0
      %1825 = vmatpush.xpose.msra.mxu0 0.0
      %1826 = vmatpush.xpose.msra.mxu0 0.0
      %1827 = vmatpush.xpose.msra.mxu0 0.0
      %1828 = vmatpush.xpose.msra.mxu0 0.0
      %1829 = vmatpush.xpose.msra.mxu0 %v1812
      %1830 = vmatmul.f32.gmra.mxu0 %v1809
      %v1831 = vpop.f32.mrf.mxu0
      %v1832 = vadd.f32 0.0, %v1831
      %1833 = vdwg.mxu0
      %v1834 = vsel %vm763, %v1299, 0
      %v1837 = vsel %vm763, %v1190, 0
      %1839 = vmatpush.xpose.msra.mxu0 0.0
      %1840 = vmatpush.xpose.msra.mxu0 0.0
      %1841 = vmatpush.xpose.msra.mxu0 0.0
      %1842 = vmatpush.xpose.msra.mxu0 0.0
      %1843 = vmatpush.xpose.msra.mxu0 0.0
      %1844 = vmatpush.xpose.msra.mxu0 0.0
      %1845 = vmatpush.xpose.msra.mxu0 0.0
      %1846 = vmatpush.xpose.msra.mxu0 0.0
      %1847 = vmatpush.xpose.msra.mxu0 0.0
      %1848 = vmatpush.xpose.msra.mxu0 0.0
      %1849 = vmatpush.xpose.msra.mxu0 0.0
      %1850 = vmatpush.xpose.msra.mxu0 0.0
      %1851 = vmatpush.xpose.msra.mxu0 0.0
      %1852 = vmatpush.xpose.msra.mxu0 0.0
      %1853 = vmatpush.xpose.msra.mxu0 0.0
      %1854 = vmatpush.xpose.msra.mxu0 %v1837
      %1855 = vmatmul.f32.gmra.mxu0 %v1834
      %v1856 = vpop.f32.mrf.mxu0
      %v1857 = vadd.f32 0.0, %v1856
      %1858 = vdwg.mxu0
      %v1859 = vsel %vm763, %v1300, 0
      %v1862 = vsel %vm763, %v1193, 0
      %1864 = vmatpush.xpose.msra.mxu0 0.0
      %1865 = vmatpush.xpose.msra.mxu0 0.0
      %1866 = vmatpush.xpose.msra.mxu0 0.0
      %1867 = vmatpush.xpose.msra.mxu0 0.0
      %1868 = vmatpush.xpose.msra.mxu0 0.0
      %1869 = vmatpush.xpose.msra.mxu0 0.0
      %1870 = vmatpush.xpose.msra.mxu0 0.0
      %1871 = vmatpush.xpose.msra.mxu0 0.0
      %1872 = vmatpush.xpose.msra.mxu0 0.0
      %1873 = vmatpush.xpose.msra.mxu0 0.0
      %1874 = vmatpush.xpose.msra.mxu0 0.0
      %1875 = vmatpush.xpose.msra.mxu0 0.0
      %1876 = vmatpush.xpose.msra.mxu0 0.0
      %1877 = vmatpush.xpose.msra.mxu0 0.0
      %1878 = vmatpush.xpose.msra.mxu0 0.0
      %1879 = vmatpush.xpose.msra.mxu0 %v1862
      %1880 = vmatmul.f32.gmra.mxu0 %v1859
      %v1881 = vpop.f32.mrf.mxu0
      %v1882 = vadd.f32 0.0, %v1881
      %1883 = vdwg.mxu0
      %v1884 = vsel %vm763, %v1301, 0
      %v1887 = vsel %vm763, %v1196, 0
      %1889 = vmatpush.xpose.msra.mxu0 0.0
      %1890 = vmatpush.xpose.msra.mxu0 0.0
      %1891 = vmatpush.xpose.msra.mxu0 0.0
      %1892 = vmatpush.xpose.msra.mxu0 0.0
      %1893 = vmatpush.xpose.msra.mxu0 0.0
      %1894 = vmatpush.xpose.msra.mxu0 0.0
      %1895 = vmatpush.xpose.msra.mxu0 0.0
      %1896 = vmatpush.xpose.msra.mxu0 0.0
      %1897 = vmatpush.xpose.msra.mxu0 0.0
      %1898 = vmatpush.xpose.msra.mxu0 0.0
      %1899 = vmatpush.xpose.msra.mxu0 0.0
      %1900 = vmatpush.xpose.msra.mxu0 0.0
      %1901 = vmatpush.xpose.msra.mxu0 0.0
      %1902 = vmatpush.xpose.msra.mxu0 0.0
      %1903 = vmatpush.xpose.msra.mxu0 0.0
      %1904 = vmatpush.xpose.msra.mxu0 %v1887
      %1905 = vmatmul.f32.gmra.mxu0 %v1884
      %v1906 = vpop.f32.mrf.mxu0
      %v1907 = vadd.f32 0.0, %v1906
      %1908 = vdwg.mxu0
      %v1909 = vsel %vm763, %v1276, 0
      %v1912 = vsel %vm763, %v1199, 0
      %1914 = vmatpush.xpose.msra.mxu0 0.0
      %1915 = vmatpush.xpose.msra.mxu0 0.0
      %1916 = vmatpush.xpose.msra.mxu0 0.0
      %1917 = vmatpush.xpose.msra.mxu0 0.0
      %1918 = vmatpush.xpose.msra.mxu0 0.0
      %1919 = vmatpush.xpose.msra.mxu0 0.0
      %1920 = vmatpush.xpose.msra.mxu0 0.0
      %1921 = vmatpush.xpose.msra.mxu0 0.0
      %1922 = vmatpush.xpose.msra.mxu0 0.0
      %1923 = vmatpush.xpose.msra.mxu0 0.0
      %1924 = vmatpush.xpose.msra.mxu0 0.0
      %1925 = vmatpush.xpose.msra.mxu0 0.0
      %1926 = vmatpush.xpose.msra.mxu0 0.0
      %1927 = vmatpush.xpose.msra.mxu0 0.0
      %1928 = vmatpush.xpose.msra.mxu0 0.0
      %1929 = vmatpush.xpose.msra.mxu0 %v1912
      %1930 = vmatmul.f32.gmra.mxu0 %v1909
      %v1931 = vpop.f32.mrf.mxu0
      %v1932 = vadd.f32 0.0, %v1931
      %1933 = vdwg.mxu0
      %v1934 = vsel %vm763, %v1302, 0
      %v1937 = vsel %vm763, %v1202, 0
      %1939 = vmatpush.xpose.msra.mxu0 0.0
      %1940 = vmatpush.xpose.msra.mxu0 0.0
      %1941 = vmatpush.xpose.msra.mxu0 0.0
      %1942 = vmatpush.xpose.msra.mxu0 0.0
      %1943 = vmatpush.xpose.msra.mxu0 0.0
      %1944 = vmatpush.xpose.msra.mxu0 0.0
      %1945 = vmatpush.xpose.msra.mxu0 0.0
      %1946 = vmatpush.xpose.msra.mxu0 0.0
      %1947 = vmatpush.xpose.msra.mxu0 0.0
      %1948 = vmatpush.xpose.msra.mxu0 0.0
      %1949 = vmatpush.xpose.msra.mxu0 0.0
      %1950 = vmatpush.xpose.msra.mxu0 0.0
      %1951 = vmatpush.xpose.msra.mxu0 0.0
      %1952 = vmatpush.xpose.msra.mxu0 0.0
      %1953 = vmatpush.xpose.msra.mxu0 0.0
      %1954 = vmatpush.xpose.msra.mxu0 %v1937
      %1955 = vmatmul.f32.gmra.mxu0 %v1934
      %v1956 = vpop.f32.mrf.mxu0
      %v1957 = vadd.f32 0.0, %v1956
      %1958 = vdwg.mxu0
      %v1959 = vsel %vm763, %v1303, 0
      %v1962 = vsel %vm763, %v1205, 0
      %1964 = vmatpush.xpose.msra.mxu0 0.0
      %1965 = vmatpush.xpose.msra.mxu0 0.0
      %1966 = vmatpush.xpose.msra.mxu0 0.0
      %1967 = vmatpush.xpose.msra.mxu0 0.0
      %1968 = vmatpush.xpose.msra.mxu0 0.0
      %1969 = vmatpush.xpose.msra.mxu0 0.0
      %1970 = vmatpush.xpose.msra.mxu0 0.0
      %1971 = vmatpush.xpose.msra.mxu0 0.0
      %1972 = vmatpush.xpose.msra.mxu0 0.0
      %1973 = vmatpush.xpose.msra.mxu0 0.0
      %1974 = vmatpush.xpose.msra.mxu0 0.0
      %1975 = vmatpush.xpose.msra.mxu0 0.0
      %1976 = vmatpush.xpose.msra.mxu0 0.0
      %1977 = vmatpush.xpose.msra.mxu0 0.0
      %1978 = vmatpush.xpose.msra.mxu0 0.0
      %1979 = vmatpush.xpose.msra.mxu0 %v1962
      %1980 = vmatmul.f32.gmra.mxu0 %v1959
      %v1981 = vpop.f32.mrf.mxu0
      %v1982 = vadd.f32 0.0, %v1981
      %1983 = vdwg.mxu0
      %v1984 = vsel %vm763, %v1304, 0
      %v1987 = vsel %vm763, %v1208, 0
      %1989 = vmatpush.xpose.msra.mxu0 0.0
      %1990 = vmatpush.xpose.msra.mxu0 0.0
      %1991 = vmatpush.xpose.msra.mxu0 0.0
      %1992 = vmatpush.xpose.msra.mxu0 0.0
      %1993 = vmatpush.xpose.msra.mxu0 0.0
      %1994 = vmatpush.xpose.msra.mxu0 0.0
      %1995 = vmatpush.xpose.msra.mxu0 0.0
      %1996 = vmatpush.xpose.msra.mxu0 0.0
      %1997 = vmatpush.xpose.msra.mxu0 0.0
      %1998 = vmatpush.xpose.msra.mxu0 0.0
      %1999 = vmatpush.xpose.msra.mxu0 0.0
      %2000 = vmatpush.xpose.msra.mxu0 0.0
      %2001 = vmatpush.xpose.msra.mxu0 0.0
      %2002 = vmatpush.xpose.msra.mxu0 0.0
      %2003 = vmatpush.xpose.msra.mxu0 0.0
      %2004 = vmatpush.xpose.msra.mxu0 %v1987
      %2005 = vmatmul.f32.gmra.mxu0 %v1984
      %v2006 = vpop.f32.mrf.mxu0
      %v2007 = vadd.f32 0.0, %v2006
      %2008 = vdwg.mxu0
      %v2009 = vsel %vm763, %v1305, 0
      %v2012 = vsel %vm763, %v1211, 0
      %2014 = vmatpush.xpose.msra.mxu0 0.0
      %2015 = vmatpush.xpose.msra.mxu0 0.0
      %2016 = vmatpush.xpose.msra.mxu0 0.0
      %2017 = vmatpush.xpose.msra.mxu0 0.0
      %2018 = vmatpush.xpose.msra.mxu0 0.0
      %2019 = vmatpush.xpose.msra.mxu0 0.0
      %2020 = vmatpush.xpose.msra.mxu0 0.0
      %2021 = vmatpush.xpose.msra.mxu0 0.0
      %2022 = vmatpush.xpose.msra.mxu0 0.0
      %2023 = vmatpush.xpose.msra.mxu0 0.0
      %2024 = vmatpush.xpose.msra.mxu0 0.0
      %2025 = vmatpush.xpose.msra.mxu0 0.0
      %2026 = vmatpush.xpose.msra.mxu0 0.0
      %2027 = vmatpush.xpose.msra.mxu0 0.0
      %2028 = vmatpush.xpose.msra.mxu0 0.0
      %2029 = vmatpush.xpose.msra.mxu0 %v2012
      %2030 = vmatmul.f32.gmra.mxu0 %v2009
      %v2031 = vpop.f32.mrf.mxu0
      %v2032 = vadd.f32 0.0, %v2031
      %2033 = vdwg.mxu0
      %v2034 = vsel %vm763, %v1306, 0
      %v2037 = vsel %vm763, %v1214, 0
      %2039 = vmatpush.xpose.msra.mxu0 0.0
      %2040 = vmatpush.xpose.msra.mxu0 0.0
      %2041 = vmatpush.xpose.msra.mxu0 0.0
      %2042 = vmatpush.xpose.msra.mxu0 0.0
      %2043 = vmatpush.xpose.msra.mxu0 0.0
      %2044 = vmatpush.xpose.msra.mxu0 0.0
      %2045 = vmatpush.xpose.msra.mxu0 0.0
      %2046 = vmatpush.xpose.msra.mxu0 0.0
      %2047 = vmatpush.xpose.msra.mxu0 0.0
      %2048 = vmatpush.xpose.msra.mxu0 0.0
      %2049 = vmatpush.xpose.msra.mxu0 0.0
      %2050 = vmatpush.xpose.msra.mxu0 0.0
      %2051 = vmatpush.xpose.msra.mxu0 0.0
      %2052 = vmatpush.xpose.msra.mxu0 0.0
      %2053 = vmatpush.xpose.msra.mxu0 0.0
      %2054 = vmatpush.xpose.msra.mxu0 %v2037
      %2055 = vmatmul.f32.gmra.mxu0 %v2034
      %v2056 = vpop.f32.mrf.mxu0
      %v2057 = vadd.f32 0.0, %v2056
      %2058 = vdwg.mxu0
      %v2059 = vsel %vm763, %v1307, 0
      %v2062 = vsel %vm763, %v1217, 0
      %2064 = vmatpush.xpose.msra.mxu0 0.0
      %2065 = vmatpush.xpose.msra.mxu0 0.0
      %2066 = vmatpush.xpose.msra.mxu0 0.0
      %2067 = vmatpush.xpose.msra.mxu0 0.0
      %2068 = vmatpush.xpose.msra.mxu0 0.0
      %2069 = vmatpush.xpose.msra.mxu0 0.0
      %2070 = vmatpush.xpose.msra.mxu0 0.0
      %2071 = vmatpush.xpose.msra.mxu0 0.0
      %2072 = vmatpush.xpose.msra.mxu0 0.0
      %2073 = vmatpush.xpose.msra.mxu0 0.0
      %2074 = vmatpush.xpose.msra.mxu0 0.0
      %2075 = vmatpush.xpose.msra.mxu0 0.0
      %2076 = vmatpush.xpose.msra.mxu0 0.0
      %2077 = vmatpush.xpose.msra.mxu0 0.0
      %2078 = vmatpush.xpose.msra.mxu0 0.0
      %2079 = vmatpush.xpose.msra.mxu0 %v2062
      %2080 = vmatmul.f32.gmra.mxu0 %v2059
      %v2081 = vpop.f32.mrf.mxu0
      %v2082 = vadd.f32 0.0, %v2081
      %2083 = vdwg.mxu0
      %v2084 = vsel %vm763, %v1308, 0
      %v2087 = vsel %vm763, %v1220, 0
      %2089 = vmatpush.xpose.msra.mxu0 0.0
      %2090 = vmatpush.xpose.msra.mxu0 0.0
      %2091 = vmatpush.xpose.msra.mxu0 0.0
      %2092 = vmatpush.xpose.msra.mxu0 0.0
      %2093 = vmatpush.xpose.msra.mxu0 0.0
      %2094 = vmatpush.xpose.msra.mxu0 0.0
      %2095 = vmatpush.xpose.msra.mxu0 0.0
      %2096 = vmatpush.xpose.msra.mxu0 0.0
      %2097 = vmatpush.xpose.msra.mxu0 0.0
      %2098 = vmatpush.xpose.msra.mxu0 0.0
      %2099 = vmatpush.xpose.msra.mxu0 0.0
      %2100 = vmatpush.xpose.msra.mxu0 0.0
      %2101 = vmatpush.xpose.msra.mxu0 0.0
      %2102 = vmatpush.xpose.msra.mxu0 0.0
      %2103 = vmatpush.xpose.msra.mxu0 0.0
      %2104 = vmatpush.xpose.msra.mxu0 %v2087
      %2105 = vmatmul.f32.gmra.mxu0 %v2084
      %v2106 = vpop.f32.mrf.mxu0
      %v2107 = vadd.f32 0.0, %v2106
      %2108 = vdwg.mxu0
      %v2109 = vlaneseq
      %v2110 = vand.u32 %v2109, 127
      %v2111 = vld [vmem:[%s449] sm:$0xff]
      %v2112 = vld [vmem:[%s449 + $0x8] sm:$0xff]
      %v2113 = vld [vmem:[%s449 + $0x10] sm:$0xff]
      %v2114 = vld [vmem:[%s449 + $0x18] sm:$0xff]
      %2115 = vset.pattern.permute.xlu0 0
      %2116 = vperm.xlu0 %2115, %v2111
      %v2117 = vpop.permute.xlu0 %2116
      %2118 = vset.pattern.permute.xlu0 0
      %2119 = vperm.xlu0 %2118, %v2112
      %v2120 = vpop.permute.xlu0 %2119
      %2121 = vset.pattern.permute.xlu0 0
      %2122 = vperm.xlu0 %2121, %v2113
      %v2123 = vpop.permute.xlu0 %2122
      %2124 = vset.pattern.permute.xlu0 0
      %2125 = vperm.xlu0 %2124, %v2114
      %v2126 = vpop.permute.xlu0 %2125
      %vm2127 = vcmp.lt.s32.totalorder %v2110, %v2117
      %vm2128 = vcmp.lt.s32.totalorder %v2110, %v2120
      %vm2129 = vcmp.lt.s32.totalorder %v2110, %v2123
      %vm2130 = vcmp.lt.s32.totalorder %v2110, %v2126
      %v2163 = vrot.slane %v1357, 7
      %vm2164 = vcmask 1041409
      %v2165 = vsel %vm2164, %v2163, %v1332
      %v2166 = vrot.slane %v1382, 6
      %vm2167 = vcmask 1042434
      %v2168 = vsel %vm2167, %v2166, %v2165
      %v2169 = vrot.slane %v1407, 5
      %vm2170 = vcmask 1043459
      %v2171 = vsel %vm2170, %v2169, %v2168
      %v2172 = vrot.slane %v1432, 4
      %vm2173 = vcmask 1044484
      %v2174 = vsel %vm2173, %v2172, %v2171
      %v2175 = vrot.slane %v1457, 3
      %vm2176 = vcmask 1045509
      %v2177 = vsel %vm2176, %v2175, %v2174
      %v2178 = vrot.slane %v1482, 2
      %vm2179 = vcmask 1046534
      %v2180 = vsel %vm2179, %v2178, %v2177
      %v2181 = vrot.slane %v1507, 1
      %vm2182 = vcmask 1047559
      %v2183 = vsel %vm2182, %v2181, %v2180
      %v2184 = vrot.slane %v1557, 7
      %v2185 = vsel %vm2164, %v2184, %v1532
      %v2186 = vrot.slane %v1582, 6
      %v2187 = vsel %vm2167, %v2186, %v2185
      %v2188 = vrot.slane %v1607, 5
      %v2189 = vsel %vm2170, %v2188, %v2187
      %v2190 = vrot.slane %v1632, 4
      %v2191 = vsel %vm2173, %v2190, %v2189
      %v2192 = vrot.slane %v1657, 3
      %v2193 = vsel %vm2176, %v2192, %v2191
      %v2194 = vrot.slane %v1682, 2
      %v2195 = vsel %vm2179, %v2194, %v2193
      %v2196 = vrot.slane %v1707, 1
      %v2197 = vsel %vm2182, %v2196, %v2195
      %v2198 = vrot.slane %v1757, 7
      %v2199 = vsel %vm2164, %v2198, %v1732
      %v2200 = vrot.slane %v1782, 6
      %v2201 = vsel %vm2167, %v2200, %v2199
      %v2202 = vrot.slane %v1807, 5
      %v2203 = vsel %vm2170, %v2202, %v2201
      %v2204 = vrot.slane %v1832, 4
      %v2205 = vsel %vm2173, %v2204, %v2203
      %v2206 = vrot.slane %v1857, 3
      %v2207 = vsel %vm2176, %v2206, %v2205
      %v2208 = vrot.slane %v1882, 2
      %v2209 = vsel %vm2179, %v2208, %v2207
      %v2210 = vrot.slane %v1907, 1
      %v2211 = vsel %vm2182, %v2210, %v2209
      %v2212 = vrot.slane %v1957, 7
      %v2213 = vsel %vm2164, %v2212, %v1932
      %v2214 = vrot.slane %v1982, 6
      %v2215 = vsel %vm2167, %v2214, %v2213
      %v2216 = vrot.slane %v2007, 5
      %v2217 = vsel %vm2170, %v2216, %v2215
      %v2218 = vrot.slane %v2032, 4
      %v2219 = vsel %vm2173, %v2218, %v2217
      %v2220 = vrot.slane %v2057, 3
      %v2221 = vsel %vm2176, %v2220, %v2219
      %v2222 = vrot.slane %v2082, 2
      %v2223 = vsel %vm2179, %v2222, %v2221
      %v2224 = vrot.slane %v2107, 1
      %v2225 = vsel %vm2182, %v2224, %v2223
      %v2230 = vsel %vm2127, %v2183, -1e+30
      %v2231 = vsel %vm2128, %v2197, -1e+30
      %v2232 = vsel %vm2129, %v2211, -1e+30
      %v2233 = vsel %vm2130, %v2225, -1e+30
      %vm2234 = vcmask 64512
      %v2235 = vsel %vm2234, %v2230, -inf
      %2236 = vmax.xlane.f32.xlu0 %v2235
      %v2237 = vpop.xlane.xlu0 %2236
      %v2238 = vsel %vm2234, %v2231, -inf
      %2239 = vmax.xlane.f32.xlu0 %v2238
      %v2240 = vpop.xlane.xlu0 %2239
      %v2241 = vsel %vm2234, %v2232, -inf
      %2242 = vmax.xlane.f32.xlu0 %v2241
      %v2243 = vpop.xlane.xlu0 %2242
      %v2244 = vsel %vm2234, %v2233, -inf
      %2245 = vmax.xlane.f32.xlu0 %v2244
      %v2246 = vpop.xlane.xlu0 %2245
      %v2247 = vsub.f32 %v2230, %v2237
      %v2248 = vsub.f32 %v2231, %v2240
      %v2249 = vsub.f32 %v2232, %v2243
      %v2250 = vsub.f32 %v2233, %v2246
      %v2251 = vmul.f32 %v2247, 1.442695
      %v2252 = vpow.pop %v2251
      %v2253 = vmul.f32 %v2248, 1.442695
      %v2254 = vpow.pop %v2253
      %v2255 = vmul.f32 %v2249, 1.442695
      %v2256 = vpow.pop %v2255
      %v2257 = vmul.f32 %v2250, 1.442695
      %v2258 = vpow.pop %v2257
      %v2259 = vsel %vm2127, %v2252, 0.0
      %v2260 = vsel %vm2128, %v2254, 0.0
      %v2261 = vsel %vm2129, %v2256, 0.0
      %v2262 = vsel %vm2130, %v2258, 0.0
      %v2263 = vsel %vm2234, %v2259, 0.0
      %2264 = vadd.xlane.f32.xlu0 %v2263
      %v2265 = vpop.xlane.xlu0 %2264
      %v2266 = vsel %vm2234, %v2260, 0.0
      %2267 = vadd.xlane.f32.xlu0 %v2266
      %v2268 = vpop.xlane.xlu0 %2267
      %v2269 = vsel %vm2234, %v2261, 0.0
      %2270 = vadd.xlane.f32.xlu0 %v2269
      %v2271 = vpop.xlane.xlu0 %2270
      %v2272 = vsel %vm2234, %v2262, 0.0
      %2273 = vadd.xlane.f32.xlu0 %v2272
      %v2274 = vpop.xlane.xlu0 %2273
      %v2275 = vmax.f32 %v2265, 1e-30
      %v2276 = vmax.f32 %v2268, 1e-30
      %v2277 = vmax.f32 %v2271, 1e-30
      %v2278 = vmax.f32 %v2274, 1e-30
      %v2279 = vrcp.pop %v2275
      %v2280 = vmul.f32 %v2275, %v2279
      %v2281 = vsub.f32 1.0, %v2280
      %v2282 = vmul.f32 %v2279, %v2281
      %v2283 = vadd.f32 %v2279, %v2282
      %vm2284 = vweird.f32 %v2275
      %vm2285 = vweird.f32 %v2279
      %vm2286 = vmor %vm2284, %vm2285
      %v2287 = vsel %vm2286, %v2279, %v2283
      %v2288 = vand.u32 2147483647, %v2275
      %vm2289 = vcmp.eq.f32.partialorder %v2288, 8.507059e+37
      %v2290 = vand.u32 %v2275, 2147483648
      %v2291 = vor.u32 1.1754944e-38, %v2290
      %v2292 = vsel %vm2289, %v2291, %v2287
      %v2293 = vrcp.pop %v2276
      %v2294 = vmul.f32 %v2276, %v2293
      %v2295 = vsub.f32 1.0, %v2294
      %v2296 = vmul.f32 %v2293, %v2295
      %v2297 = vadd.f32 %v2293, %v2296
      %vm2298 = vweird.f32 %v2276
      %vm2299 = vweird.f32 %v2293
      %vm2300 = vmor %vm2298, %vm2299
      %v2301 = vsel %vm2300, %v2293, %v2297
      %v2302 = vand.u32 2147483647, %v2276
      %vm2303 = vcmp.eq.f32.partialorder %v2302, 8.507059e+37
      %v2304 = vand.u32 %v2276, 2147483648
      %v2305 = vor.u32 1.1754944e-38, %v2304
      %v2306 = vsel %vm2303, %v2305, %v2301
      %v2307 = vrcp.pop %v2277
      %v2308 = vmul.f32 %v2277, %v2307
      %v2309 = vsub.f32 1.0, %v2308
      %v2310 = vmul.f32 %v2307, %v2309
      %v2311 = vadd.f32 %v2307, %v2310
      %vm2312 = vweird.f32 %v2277
      %vm2313 = vweird.f32 %v2307
      %vm2314 = vmor %vm2312, %vm2313
      %v2315 = vsel %vm2314, %v2307, %v2311
      %v2316 = vand.u32 2147483647, %v2277
      %vm2317 = vcmp.eq.f32.partialorder %v2316, 8.507059e+37
      %v2318 = vand.u32 %v2277, 2147483648
      %v2319 = vor.u32 1.1754944e-38, %v2318
      %v2320 = vsel %vm2317, %v2319, %v2315
      %v2321 = vrcp.pop %v2278
      %v2322 = vmul.f32 %v2278, %v2321
      %v2323 = vsub.f32 1.0, %v2322
      %v2324 = vmul.f32 %v2321, %v2323
      %v2325 = vadd.f32 %v2321, %v2324
      %vm2326 = vweird.f32 %v2278
      %vm2327 = vweird.f32 %v2321
      %vm2328 = vmor %vm2326, %vm2327
      %v2329 = vsel %vm2328, %v2321, %v2325
      %v2330 = vand.u32 2147483647, %v2278
      %vm2331 = vcmp.eq.f32.partialorder %v2330, 8.507059e+37
      %v2332 = vand.u32 %v2278, 2147483648
      %v2333 = vor.u32 1.1754944e-38, %v2332
      %v2334 = vsel %vm2331, %v2333, %v2329
      %v2335 = vmul.f32 %v2259, %v2292
      %v2336 = vmul.f32 %v2260, %v2306
      %v2337 = vmul.f32 %v2261, %v2320
      %v2338 = vmul.f32 %v2262, %v2334
      %v2343 = vrot.slane %v2335, 1
      %v2344 = vrot.slane %v2335, 2
      %v2345 = vrot.slane %v2335, 3
      %v2346 = vrot.slane %v2335, 4
      %v2347 = vrot.slane %v2335, 5
      %v2348 = vrot.slane %v2335, 6
      %v2349 = vrot.slane %v2335, 7
      %v2350 = vrot.slane %v2336, 1
      %v2351 = vrot.slane %v2336, 2
      %v2352 = vrot.slane %v2336, 3
      %v2353 = vrot.slane %v2336, 4
      %v2354 = vrot.slane %v2336, 5
      %v2355 = vrot.slane %v2336, 6
      %v2356 = vrot.slane %v2336, 7
      %v2357 = vrot.slane %v2337, 1
      %v2358 = vrot.slane %v2337, 2
      %v2359 = vrot.slane %v2337, 3
      %v2360 = vrot.slane %v2337, 4
      %v2361 = vrot.slane %v2337, 5
      %v2362 = vrot.slane %v2337, 6
      %v2363 = vrot.slane %v2337, 7
      %v2364 = vrot.slane %v2338, 1
      %v2365 = vrot.slane %v2338, 2
      %v2366 = vrot.slane %v2338, 3
      %v2367 = vrot.slane %v2338, 4
      %v2368 = vrot.slane %v2338, 5
      %v2369 = vrot.slane %v2338, 6
      %v2370 = vrot.slane %v2338, 7
      %2371 = vrot.lane.b32.xlu0 %v1127, 96
      %v2372 = vpop.permute.xlu0 %2371
      %v2374 = vsel %vm2234, %v2335, 0
      %2376 = vmatpush.msra.mxu0 0.0
      %2377 = vmatpush.msra.mxu0 0.0
      %2378 = vmatpush.msra.mxu0 0.0
      %2379 = vmatpush.msra.mxu0 0.0
      %2380 = vmatpush.msra.mxu0 0.0
      %2381 = vmatpush.msra.mxu0 0.0
      %2382 = vmatpush.msra.mxu0 0.0
      %2383 = vmatpush.msra.mxu0 0.0
      %2384 = vmatpush.msra.mxu0 0.0
      %2385 = vmatpush.msra.mxu0 0.0
      %2386 = vmatpush.msra.mxu0 0.0
      %2387 = vmatpush.msra.mxu0 0.0
      %2388 = vmatpush.msra.mxu0 0.0
      %2389 = vmatpush.msra.mxu0 0.0
      %2390 = vmatpush.msra.mxu0 0.0
      %2391 = vmatpush.msra.mxu0 %v2372
      %2392 = vmatmul.f32.gmra.mxu0 %v2374
      %v2393 = vpop.f32.mrf.mxu0
      %v2394 = vadd.f32 0.0, %v2393
      %2395 = vdwg.mxu0
      %2396 = vrot.lane.b32.xlu0 %v1130, 96
      %v2397 = vpop.permute.xlu0 %2396
      %v2399 = vsel %vm2234, %v2343, 0
      %2401 = vmatpush.msra.mxu0 0.0
      %2402 = vmatpush.msra.mxu0 0.0
      %2403 = vmatpush.msra.mxu0 0.0
      %2404 = vmatpush.msra.mxu0 0.0
      %2405 = vmatpush.msra.mxu0 0.0
      %2406 = vmatpush.msra.mxu0 0.0
      %2407 = vmatpush.msra.mxu0 0.0
      %2408 = vmatpush.msra.mxu0 0.0
      %2409 = vmatpush.msra.mxu0 0.0
      %2410 = vmatpush.msra.mxu0 0.0
      %2411 = vmatpush.msra.mxu0 0.0
      %2412 = vmatpush.msra.mxu0 0.0
      %2413 = vmatpush.msra.mxu0 0.0
      %2414 = vmatpush.msra.mxu0 0.0
      %2415 = vmatpush.msra.mxu0 0.0
      %2416 = vmatpush.msra.mxu0 %v2397
      %2417 = vmatmul.f32.gmra.mxu0 %v2399
      %v2418 = vpop.f32.mrf.mxu0
      %v2419 = vadd.f32 0.0, %v2418
      %2420 = vdwg.mxu0
      %2421 = vrot.lane.b32.xlu0 %v1133, 96
      %v2422 = vpop.permute.xlu0 %2421
      %v2424 = vsel %vm2234, %v2344, 0
      %2426 = vmatpush.msra.mxu0 0.0
      %2427 = vmatpush.msra.mxu0 0.0
      %2428 = vmatpush.msra.mxu0 0.0
      %2429 = vmatpush.msra.mxu0 0.0
      %2430 = vmatpush.msra.mxu0 0.0
      %2431 = vmatpush.msra.mxu0 0.0
      %2432 = vmatpush.msra.mxu0 0.0
      %2433 = vmatpush.msra.mxu0 0.0
      %2434 = vmatpush.msra.mxu0 0.0
      %2435 = vmatpush.msra.mxu0 0.0
      %2436 = vmatpush.msra.mxu0 0.0
      %2437 = vmatpush.msra.mxu0 0.0
      %2438 = vmatpush.msra.mxu0 0.0
      %2439 = vmatpush.msra.mxu0 0.0
      %2440 = vmatpush.msra.mxu0 0.0
      %2441 = vmatpush.msra.mxu0 %v2422
      %2442 = vmatmul.f32.gmra.mxu0 %v2424
      %v2443 = vpop.f32.mrf.mxu0
      %v2444 = vadd.f32 0.0, %v2443
      %2445 = vdwg.mxu0
      %2446 = vrot.lane.b32.xlu0 %v1136, 96
      %v2447 = vpop.permute.xlu0 %2446
      %v2449 = vsel %vm2234, %v2345, 0
      %2451 = vmatpush.msra.mxu0 0.0
      %2452 = vmatpush.msra.mxu0 0.0
      %2453 = vmatpush.msra.mxu0 0.0
      %2454 = vmatpush.msra.mxu0 0.0
      %2455 = vmatpush.msra.mxu0 0.0
      %2456 = vmatpush.msra.mxu0 0.0
      %2457 = vmatpush.msra.mxu0 0.0
      %2458 = vmatpush.msra.mxu0 0.0
      %2459 = vmatpush.msra.mxu0 0.0
      %2460 = vmatpush.msra.mxu0 0.0
      %2461 = vmatpush.msra.mxu0 0.0
      %2462 = vmatpush.msra.mxu0 0.0
      %2463 = vmatpush.msra.mxu0 0.0
      %2464 = vmatpush.msra.mxu0 0.0
      %2465 = vmatpush.msra.mxu0 0.0
      %2466 = vmatpush.msra.mxu0 %v2447
      %2467 = vmatmul.f32.gmra.mxu0 %v2449
      %v2468 = vpop.f32.mrf.mxu0
      %v2469 = vadd.f32 0.0, %v2468
      %2470 = vdwg.mxu0
      %2471 = vrot.lane.b32.xlu0 %v1139, 96
      %v2472 = vpop.permute.xlu0 %2471
      %v2474 = vsel %vm2234, %v2346, 0
      %2476 = vmatpush.msra.mxu0 0.0
      %2477 = vmatpush.msra.mxu0 0.0
      %2478 = vmatpush.msra.mxu0 0.0
      %2479 = vmatpush.msra.mxu0 0.0
      %2480 = vmatpush.msra.mxu0 0.0
      %2481 = vmatpush.msra.mxu0 0.0
      %2482 = vmatpush.msra.mxu0 0.0
      %2483 = vmatpush.msra.mxu0 0.0
      %2484 = vmatpush.msra.mxu0 0.0
      %2485 = vmatpush.msra.mxu0 0.0
      %2486 = vmatpush.msra.mxu0 0.0
      %2487 = vmatpush.msra.mxu0 0.0
      %2488 = vmatpush.msra.mxu0 0.0
      %2489 = vmatpush.msra.mxu0 0.0
      %2490 = vmatpush.msra.mxu0 0.0
      %2491 = vmatpush.msra.mxu0 %v2472
      %2492 = vmatmul.f32.gmra.mxu0 %v2474
      %v2493 = vpop.f32.mrf.mxu0
      %v2494 = vadd.f32 0.0, %v2493
      %2495 = vdwg.mxu0
      %2496 = vrot.lane.b32.xlu0 %v1142, 96
      %v2497 = vpop.permute.xlu0 %2496
      %v2499 = vsel %vm2234, %v2347, 0
      %2501 = vmatpush.msra.mxu0 0.0
      %2502 = vmatpush.msra.mxu0 0.0
      %2503 = vmatpush.msra.mxu0 0.0
      %2504 = vmatpush.msra.mxu0 0.0
      %2505 = vmatpush.msra.mxu0 0.0
      %2506 = vmatpush.msra.mxu0 0.0
      %2507 = vmatpush.msra.mxu0 0.0
      %2508 = vmatpush.msra.mxu0 0.0
      %2509 = vmatpush.msra.mxu0 0.0
      %2510 = vmatpush.msra.mxu0 0.0
      %2511 = vmatpush.msra.mxu0 0.0
      %2512 = vmatpush.msra.mxu0 0.0
      %2513 = vmatpush.msra.mxu0 0.0
      %2514 = vmatpush.msra.mxu0 0.0
      %2515 = vmatpush.msra.mxu0 0.0
      %2516 = vmatpush.msra.mxu0 %v2497
      %2517 = vmatmul.f32.gmra.mxu0 %v2499
      %v2518 = vpop.f32.mrf.mxu0
      %v2519 = vadd.f32 0.0, %v2518
      %2520 = vdwg.mxu0
      %2521 = vrot.lane.b32.xlu0 %v1145, 96
      %v2522 = vpop.permute.xlu0 %2521
      %v2524 = vsel %vm2234, %v2348, 0
      %2526 = vmatpush.msra.mxu0 0.0
      %2527 = vmatpush.msra.mxu0 0.0
      %2528 = vmatpush.msra.mxu0 0.0
      %2529 = vmatpush.msra.mxu0 0.0
      %2530 = vmatpush.msra.mxu0 0.0
      %2531 = vmatpush.msra.mxu0 0.0
      %2532 = vmatpush.msra.mxu0 0.0
      %2533 = vmatpush.msra.mxu0 0.0
      %2534 = vmatpush.msra.mxu0 0.0
      %2535 = vmatpush.msra.mxu0 0.0
      %2536 = vmatpush.msra.mxu0 0.0
      %2537 = vmatpush.msra.mxu0 0.0
      %2538 = vmatpush.msra.mxu0 0.0
      %2539 = vmatpush.msra.mxu0 0.0
      %2540 = vmatpush.msra.mxu0 0.0
      %2541 = vmatpush.msra.mxu0 %v2522
      %2542 = vmatmul.f32.gmra.mxu0 %v2524
      %v2543 = vpop.f32.mrf.mxu0
      %v2544 = vadd.f32 0.0, %v2543
      %2545 = vdwg.mxu0
      %2546 = vrot.lane.b32.xlu0 %v1148, 96
      %v2547 = vpop.permute.xlu0 %2546
      %v2549 = vsel %vm2234, %v2349, 0
      %2551 = vmatpush.msra.mxu0 0.0
      %2552 = vmatpush.msra.mxu0 0.0
      %2553 = vmatpush.msra.mxu0 0.0
      %2554 = vmatpush.msra.mxu0 0.0
      %2555 = vmatpush.msra.mxu0 0.0
      %2556 = vmatpush.msra.mxu0 0.0
      %2557 = vmatpush.msra.mxu0 0.0
      %2558 = vmatpush.msra.mxu0 0.0
      %2559 = vmatpush.msra.mxu0 0.0
      %2560 = vmatpush.msra.mxu0 0.0
      %2561 = vmatpush.msra.mxu0 0.0
      %2562 = vmatpush.msra.mxu0 0.0
      %2563 = vmatpush.msra.mxu0 0.0
      %2564 = vmatpush.msra.mxu0 0.0
      %2565 = vmatpush.msra.mxu0 0.0
      %2566 = vmatpush.msra.mxu0 %v2547
      %2567 = vmatmul.f32.gmra.mxu0 %v2549
      %v2568 = vpop.f32.mrf.mxu0
      %v2569 = vadd.f32 0.0, %v2568
      %2570 = vdwg.mxu0
      %2571 = vrot.lane.b32.xlu0 %v1151, 96
      %v2572 = vpop.permute.xlu0 %2571
      %v2574 = vsel %vm2234, %v2336, 0
      %2576 = vmatpush.msra.mxu0 0.0
      %2577 = vmatpush.msra.mxu0 0.0
      %2578 = vmatpush.msra.mxu0 0.0
      %2579 = vmatpush.msra.mxu0 0.0
      %2580 = vmatpush.msra.mxu0 0.0
      %2581 = vmatpush.msra.mxu0 0.0
      %2582 = vmatpush.msra.mxu0 0.0
      %2583 = vmatpush.msra.mxu0 0.0
      %2584 = vmatpush.msra.mxu0 0.0
      %2585 = vmatpush.msra.mxu0 0.0
      %2586 = vmatpush.msra.mxu0 0.0
      %2587 = vmatpush.msra.mxu0 0.0
      %2588 = vmatpush.msra.mxu0 0.0
      %2589 = vmatpush.msra.mxu0 0.0
      %2590 = vmatpush.msra.mxu0 0.0
      %2591 = vmatpush.msra.mxu0 %v2572
      %2592 = vmatmul.f32.gmra.mxu0 %v2574
      %v2593 = vpop.f32.mrf.mxu0
      %v2594 = vadd.f32 0.0, %v2593
      %2595 = vdwg.mxu0
      %2596 = vrot.lane.b32.xlu0 %v1154, 96
      %v2597 = vpop.permute.xlu0 %2596
      %v2599 = vsel %vm2234, %v2350, 0
      %2601 = vmatpush.msra.mxu0 0.0
      %2602 = vmatpush.msra.mxu0 0.0
      %2603 = vmatpush.msra.mxu0 0.0
      %2604 = vmatpush.msra.mxu0 0.0
      %2605 = vmatpush.msra.mxu0 0.0
      %2606 = vmatpush.msra.mxu0 0.0
      %2607 = vmatpush.msra.mxu0 0.0
      %2608 = vmatpush.msra.mxu0 0.0
      %2609 = vmatpush.msra.mxu0 0.0
      %2610 = vmatpush.msra.mxu0 0.0
      %2611 = vmatpush.msra.mxu0 0.0
      %2612 = vmatpush.msra.mxu0 0.0
      %2613 = vmatpush.msra.mxu0 0.0
      %2614 = vmatpush.msra.mxu0 0.0
      %2615 = vmatpush.msra.mxu0 0.0
      %2616 = vmatpush.msra.mxu0 %v2597
      %2617 = vmatmul.f32.gmra.mxu0 %v2599
      %v2618 = vpop.f32.mrf.mxu0
      %v2619 = vadd.f32 0.0, %v2618
      %2620 = vdwg.mxu0
      %2621 = vrot.lane.b32.xlu0 %v1157, 96
      %v2622 = vpop.permute.xlu0 %2621
      %v2624 = vsel %vm2234, %v2351, 0
      %2626 = vmatpush.msra.mxu0 0.0
      %2627 = vmatpush.msra.mxu0 0.0
      %2628 = vmatpush.msra.mxu0 0.0
      %2629 = vmatpush.msra.mxu0 0.0
      %2630 = vmatpush.msra.mxu0 0.0
      %2631 = vmatpush.msra.mxu0 0.0
      %2632 = vmatpush.msra.mxu0 0.0
      %2633 = vmatpush.msra.mxu0 0.0
      %2634 = vmatpush.msra.mxu0 0.0
      %2635 = vmatpush.msra.mxu0 0.0
      %2636 = vmatpush.msra.mxu0 0.0
      %2637 = vmatpush.msra.mxu0 0.0
      %2638 = vmatpush.msra.mxu0 0.0
      %2639 = vmatpush.msra.mxu0 0.0
      %2640 = vmatpush.msra.mxu0 0.0
      %2641 = vmatpush.msra.mxu0 %v2622
      %2642 = vmatmul.f32.gmra.mxu0 %v2624
      %v2643 = vpop.f32.mrf.mxu0
      %v2644 = vadd.f32 0.0, %v2643
      %2645 = vdwg.mxu0
      %2646 = vrot.lane.b32.xlu0 %v1160, 96
      %v2647 = vpop.permute.xlu0 %2646
      %v2649 = vsel %vm2234, %v2352, 0
      %2651 = vmatpush.msra.mxu0 0.0
      %2652 = vmatpush.msra.mxu0 0.0
      %2653 = vmatpush.msra.mxu0 0.0
      %2654 = vmatpush.msra.mxu0 0.0
      %2655 = vmatpush.msra.mxu0 0.0
      %2656 = vmatpush.msra.mxu0 0.0
      %2657 = vmatpush.msra.mxu0 0.0
      %2658 = vmatpush.msra.mxu0 0.0
      %2659 = vmatpush.msra.mxu0 0.0
      %2660 = vmatpush.msra.mxu0 0.0
      %2661 = vmatpush.msra.mxu0 0.0
      %2662 = vmatpush.msra.mxu0 0.0
      %2663 = vmatpush.msra.mxu0 0.0
      %2664 = vmatpush.msra.mxu0 0.0
      %2665 = vmatpush.msra.mxu0 0.0
      %2666 = vmatpush.msra.mxu0 %v2647
      %2667 = vmatmul.f32.gmra.mxu0 %v2649
      %v2668 = vpop.f32.mrf.mxu0
      %v2669 = vadd.f32 0.0, %v2668
      %2670 = vdwg.mxu0
      %2671 = vrot.lane.b32.xlu0 %v1163, 96
      %v2672 = vpop.permute.xlu0 %2671
      %v2674 = vsel %vm2234, %v2353, 0
      %2676 = vmatpush.msra.mxu0 0.0
      %2677 = vmatpush.msra.mxu0 0.0
      %2678 = vmatpush.msra.mxu0 0.0
      %2679 = vmatpush.msra.mxu0 0.0
      %2680 = vmatpush.msra.mxu0 0.0
      %2681 = vmatpush.msra.mxu0 0.0
      %2682 = vmatpush.msra.mxu0 0.0
      %2683 = vmatpush.msra.mxu0 0.0
      %2684 = vmatpush.msra.mxu0 0.0
      %2685 = vmatpush.msra.mxu0 0.0
      %2686 = vmatpush.msra.mxu0 0.0
      %2687 = vmatpush.msra.mxu0 0.0
      %2688 = vmatpush.msra.mxu0 0.0
      %2689 = vmatpush.msra.mxu0 0.0
      %2690 = vmatpush.msra.mxu0 0.0
      %2691 = vmatpush.msra.mxu0 %v2672
      %2692 = vmatmul.f32.gmra.mxu0 %v2674
      %v2693 = vpop.f32.mrf.mxu0
      %v2694 = vadd.f32 0.0, %v2693
      %2695 = vdwg.mxu0
      %2696 = vrot.lane.b32.xlu0 %v1166, 96
      %v2697 = vpop.permute.xlu0 %2696
      %v2699 = vsel %vm2234, %v2354, 0
      %2701 = vmatpush.msra.mxu0 0.0
      %2702 = vmatpush.msra.mxu0 0.0
      %2703 = vmatpush.msra.mxu0 0.0
      %2704 = vmatpush.msra.mxu0 0.0
      %2705 = vmatpush.msra.mxu0 0.0
      %2706 = vmatpush.msra.mxu0 0.0
      %2707 = vmatpush.msra.mxu0 0.0
      %2708 = vmatpush.msra.mxu0 0.0
      %2709 = vmatpush.msra.mxu0 0.0
      %2710 = vmatpush.msra.mxu0 0.0
      %2711 = vmatpush.msra.mxu0 0.0
      %2712 = vmatpush.msra.mxu0 0.0
      %2713 = vmatpush.msra.mxu0 0.0
      %2714 = vmatpush.msra.mxu0 0.0
      %2715 = vmatpush.msra.mxu0 0.0
      %2716 = vmatpush.msra.mxu0 %v2697
      %2717 = vmatmul.f32.gmra.mxu0 %v2699
      %v2718 = vpop.f32.mrf.mxu0
      %v2719 = vadd.f32 0.0, %v2718
      %2720 = vdwg.mxu0
      %2721 = vrot.lane.b32.xlu0 %v1169, 96
      %v2722 = vpop.permute.xlu0 %2721
      %v2724 = vsel %vm2234, %v2355, 0
      %2726 = vmatpush.msra.mxu0 0.0
      %2727 = vmatpush.msra.mxu0 0.0
      %2728 = vmatpush.msra.mxu0 0.0
      %2729 = vmatpush.msra.mxu0 0.0
      %2730 = vmatpush.msra.mxu0 0.0
      %2731 = vmatpush.msra.mxu0 0.0
      %2732 = vmatpush.msra.mxu0 0.0
      %2733 = vmatpush.msra.mxu0 0.0
      %2734 = vmatpush.msra.mxu0 0.0
      %2735 = vmatpush.msra.mxu0 0.0
      %2736 = vmatpush.msra.mxu0 0.0
      %2737 = vmatpush.msra.mxu0 0.0
      %2738 = vmatpush.msra.mxu0 0.0
      %2739 = vmatpush.msra.mxu0 0.0
      %2740 = vmatpush.msra.mxu0 0.0
      %2741 = vmatpush.msra.mxu0 %v2722
      %2742 = vmatmul.f32.gmra.mxu0 %v2724
      %v2743 = vpop.f32.mrf.mxu0
      %v2744 = vadd.f32 0.0, %v2743
      %2745 = vdwg.mxu0
      %2746 = vrot.lane.b32.xlu0 %v1172, 96
      %v2747 = vpop.permute.xlu0 %2746
      %v2749 = vsel %vm2234, %v2356, 0
      %2751 = vmatpush.msra.mxu0 0.0
      %2752 = vmatpush.msra.mxu0 0.0
      %2753 = vmatpush.msra.mxu0 0.0
      %2754 = vmatpush.msra.mxu0 0.0
      %2755 = vmatpush.msra.mxu0 0.0
      %2756 = vmatpush.msra.mxu0 0.0
      %2757 = vmatpush.msra.mxu0 0.0
      %2758 = vmatpush.msra.mxu0 0.0
      %2759 = vmatpush.msra.mxu0 0.0
      %2760 = vmatpush.msra.mxu0 0.0
      %2761 = vmatpush.msra.mxu0 0.0
      %2762 = vmatpush.msra.mxu0 0.0
      %2763 = vmatpush.msra.mxu0 0.0
      %2764 = vmatpush.msra.mxu0 0.0
      %2765 = vmatpush.msra.mxu0 0.0
      %2766 = vmatpush.msra.mxu0 %v2747
      %2767 = vmatmul.f32.gmra.mxu0 %v2749
      %v2768 = vpop.f32.mrf.mxu0
      %v2769 = vadd.f32 0.0, %v2768
      %2770 = vdwg.mxu0
      %2771 = vrot.lane.b32.xlu0 %v1175, 96
      %v2772 = vpop.permute.xlu0 %2771
      %v2774 = vsel %vm2234, %v2337, 0
      %2776 = vmatpush.msra.mxu0 0.0
      %2777 = vmatpush.msra.mxu0 0.0
      %2778 = vmatpush.msra.mxu0 0.0
      %2779 = vmatpush.msra.mxu0 0.0
      %2780 = vmatpush.msra.mxu0 0.0
      %2781 = vmatpush.msra.mxu0 0.0
      %2782 = vmatpush.msra.mxu0 0.0
      %2783 = vmatpush.msra.mxu0 0.0
      %2784 = vmatpush.msra.mxu0 0.0
      %2785 = vmatpush.msra.mxu0 0.0
      %2786 = vmatpush.msra.mxu0 0.0
      %2787 = vmatpush.msra.mxu0 0.0
      %2788 = vmatpush.msra.mxu0 0.0
      %2789 = vmatpush.msra.mxu0 0.0
      %2790 = vmatpush.msra.mxu0 0.0
      %2791 = vmatpush.msra.mxu0 %v2772
      %2792 = vmatmul.f32.gmra.mxu0 %v2774
      %v2793 = vpop.f32.mrf.mxu0
      %v2794 = vadd.f32 0.0, %v2793
      %2795 = vdwg.mxu0
      %2796 = vrot.lane.b32.xlu0 %v1178, 96
      %v2797 = vpop.permute.xlu0 %2796
      %v2799 = vsel %vm2234, %v2357, 0
      %2801 = vmatpush.msra.mxu0 0.0
      %2802 = vmatpush.msra.mxu0 0.0
      %2803 = vmatpush.msra.mxu0 0.0
      %2804 = vmatpush.msra.mxu0 0.0
      %2805 = vmatpush.msra.mxu0 0.0
      %2806 = vmatpush.msra.mxu0 0.0
      %2807 = vmatpush.msra.mxu0 0.0
      %2808 = vmatpush.msra.mxu0 0.0
      %2809 = vmatpush.msra.mxu0 0.0
      %2810 = vmatpush.msra.mxu0 0.0
      %2811 = vmatpush.msra.mxu0 0.0
      %2812 = vmatpush.msra.mxu0 0.0
      %2813 = vmatpush.msra.mxu0 0.0
      %2814 = vmatpush.msra.mxu0 0.0
      %2815 = vmatpush.msra.mxu0 0.0
      %2816 = vmatpush.msra.mxu0 %v2797
      %2817 = vmatmul.f32.gmra.mxu0 %v2799
      %v2818 = vpop.f32.mrf.mxu0
      %v2819 = vadd.f32 0.0, %v2818
      %2820 = vdwg.mxu0
      %2821 = vrot.lane.b32.xlu0 %v1181, 96
      %v2822 = vpop.permute.xlu0 %2821
      %v2824 = vsel %vm2234, %v2358, 0
      %2826 = vmatpush.msra.mxu0 0.0
      %2827 = vmatpush.msra.mxu0 0.0
      %2828 = vmatpush.msra.mxu0 0.0
      %2829 = vmatpush.msra.mxu0 0.0
      %2830 = vmatpush.msra.mxu0 0.0
      %2831 = vmatpush.msra.mxu0 0.0
      %2832 = vmatpush.msra.mxu0 0.0
      %2833 = vmatpush.msra.mxu0 0.0
      %2834 = vmatpush.msra.mxu0 0.0
      %2835 = vmatpush.msra.mxu0 0.0
      %2836 = vmatpush.msra.mxu0 0.0
      %2837 = vmatpush.msra.mxu0 0.0
      %2838 = vmatpush.msra.mxu0 0.0
      %2839 = vmatpush.msra.mxu0 0.0
      %2840 = vmatpush.msra.mxu0 0.0
      %2841 = vmatpush.msra.mxu0 %v2822
      %2842 = vmatmul.f32.gmra.mxu0 %v2824
      %v2843 = vpop.f32.mrf.mxu0
      %v2844 = vadd.f32 0.0, %v2843
      %2845 = vdwg.mxu0
      %2846 = vrot.lane.b32.xlu0 %v1184, 96
      %v2847 = vpop.permute.xlu0 %2846
      %v2849 = vsel %vm2234, %v2359, 0
      %2851 = vmatpush.msra.mxu0 0.0
      %2852 = vmatpush.msra.mxu0 0.0
      %2853 = vmatpush.msra.mxu0 0.0
      %2854 = vmatpush.msra.mxu0 0.0
      %2855 = vmatpush.msra.mxu0 0.0
      %2856 = vmatpush.msra.mxu0 0.0
      %2857 = vmatpush.msra.mxu0 0.0
      %2858 = vmatpush.msra.mxu0 0.0
      %2859 = vmatpush.msra.mxu0 0.0
      %2860 = vmatpush.msra.mxu0 0.0
      %2861 = vmatpush.msra.mxu0 0.0
      %2862 = vmatpush.msra.mxu0 0.0
      %2863 = vmatpush.msra.mxu0 0.0
      %2864 = vmatpush.msra.mxu0 0.0
      %2865 = vmatpush.msra.mxu0 0.0
      %2866 = vmatpush.msra.mxu0 %v2847
      %2867 = vmatmul.f32.gmra.mxu0 %v2849
      %v2868 = vpop.f32.mrf.mxu0
      %v2869 = vadd.f32 0.0, %v2868
      %2870 = vdwg.mxu0
      %2871 = vrot.lane.b32.xlu0 %v1187, 96
      %v2872 = vpop.permute.xlu0 %2871
      %v2874 = vsel %vm2234, %v2360, 0
      %2876 = vmatpush.msra.mxu0 0.0
      %2877 = vmatpush.msra.mxu0 0.0
      %2878 = vmatpush.msra.mxu0 0.0
      %2879 = vmatpush.msra.mxu0 0.0
      %2880 = vmatpush.msra.mxu0 0.0
      %2881 = vmatpush.msra.mxu0 0.0
      %2882 = vmatpush.msra.mxu0 0.0
      %2883 = vmatpush.msra.mxu0 0.0
      %2884 = vmatpush.msra.mxu0 0.0
      %2885 = vmatpush.msra.mxu0 0.0
      %2886 = vmatpush.msra.mxu0 0.0
      %2887 = vmatpush.msra.mxu0 0.0
      %2888 = vmatpush.msra.mxu0 0.0
      %2889 = vmatpush.msra.mxu0 0.0
      %2890 = vmatpush.msra.mxu0 0.0
      %2891 = vmatpush.msra.mxu0 %v2872
      %2892 = vmatmul.f32.gmra.mxu0 %v2874
      %v2893 = vpop.f32.mrf.mxu0
      %v2894 = vadd.f32 0.0, %v2893
      %2895 = vdwg.mxu0
      %2896 = vrot.lane.b32.xlu0 %v1190, 96
      %v2897 = vpop.permute.xlu0 %2896
      %v2899 = vsel %vm2234, %v2361, 0
      %2901 = vmatpush.msra.mxu0 0.0
      %2902 = vmatpush.msra.mxu0 0.0
      %2903 = vmatpush.msra.mxu0 0.0
      %2904 = vmatpush.msra.mxu0 0.0
      %2905 = vmatpush.msra.mxu0 0.0
      %2906 = vmatpush.msra.mxu0 0.0
      %2907 = vmatpush.msra.mxu0 0.0
      %2908 = vmatpush.msra.mxu0 0.0
      %2909 = vmatpush.msra.mxu0 0.0
      %2910 = vmatpush.msra.mxu0 0.0
      %2911 = vmatpush.msra.mxu0 0.0
      %2912 = vmatpush.msra.mxu0 0.0
      %2913 = vmatpush.msra.mxu0 0.0
      %2914 = vmatpush.msra.mxu0 0.0
      %2915 = vmatpush.msra.mxu0 0.0
      %2916 = vmatpush.msra.mxu0 %v2897
      %2917 = vmatmul.f32.gmra.mxu0 %v2899
      %v2918 = vpop.f32.mrf.mxu0
      %v2919 = vadd.f32 0.0, %v2918
      %2920 = vdwg.mxu0
      %2921 = vrot.lane.b32.xlu0 %v1193, 96
      %v2922 = vpop.permute.xlu0 %2921
      %v2924 = vsel %vm2234, %v2362, 0
      %2926 = vmatpush.msra.mxu0 0.0
      %2927 = vmatpush.msra.mxu0 0.0
      %2928 = vmatpush.msra.mxu0 0.0
      %2929 = vmatpush.msra.mxu0 0.0
      %2930 = vmatpush.msra.mxu0 0.0
      %2931 = vmatpush.msra.mxu0 0.0
      %2932 = vmatpush.msra.mxu0 0.0
      %2933 = vmatpush.msra.mxu0 0.0
      %2934 = vmatpush.msra.mxu0 0.0
      %2935 = vmatpush.msra.mxu0 0.0
      %2936 = vmatpush.msra.mxu0 0.0
      %2937 = vmatpush.msra.mxu0 0.0
      %2938 = vmatpush.msra.mxu0 0.0
      %2939 = vmatpush.msra.mxu0 0.0
      %2940 = vmatpush.msra.mxu0 0.0
      %2941 = vmatpush.msra.mxu0 %v2922
      %2942 = vmatmul.f32.gmra.mxu0 %v2924
      %v2943 = vpop.f32.mrf.mxu0
      %v2944 = vadd.f32 0.0, %v2943
      %2945 = vdwg.mxu0
      %2946 = vrot.lane.b32.xlu0 %v1196, 96
      %v2947 = vpop.permute.xlu0 %2946
      %v2949 = vsel %vm2234, %v2363, 0
      %2951 = vmatpush.msra.mxu0 0.0
      %2952 = vmatpush.msra.mxu0 0.0
      %2953 = vmatpush.msra.mxu0 0.0
      %2954 = vmatpush.msra.mxu0 0.0
      %2955 = vmatpush.msra.mxu0 0.0
      %2956 = vmatpush.msra.mxu0 0.0
      %2957 = vmatpush.msra.mxu0 0.0
      %2958 = vmatpush.msra.mxu0 0.0
      %2959 = vmatpush.msra.mxu0 0.0
      %2960 = vmatpush.msra.mxu0 0.0
      %2961 = vmatpush.msra.mxu0 0.0
      %2962 = vmatpush.msra.mxu0 0.0
      %2963 = vmatpush.msra.mxu0 0.0
      %2964 = vmatpush.msra.mxu0 0.0
      %2965 = vmatpush.msra.mxu0 0.0
      %2966 = vmatpush.msra.mxu0 %v2947
      %2967 = vmatmul.f32.gmra.mxu0 %v2949
      %v2968 = vpop.f32.mrf.mxu0
      %v2969 = vadd.f32 0.0, %v2968
      %2970 = vdwg.mxu0
      %2971 = vrot.lane.b32.xlu0 %v1199, 96
      %v2972 = vpop.permute.xlu0 %2971
      %v2974 = vsel %vm2234, %v2338, 0
      %2976 = vmatpush.msra.mxu0 0.0
      %2977 = vmatpush.msra.mxu0 0.0
      %2978 = vmatpush.msra.mxu0 0.0
      %2979 = vmatpush.msra.mxu0 0.0
      %2980 = vmatpush.msra.mxu0 0.0
      %2981 = vmatpush.msra.mxu0 0.0
      %2982 = vmatpush.msra.mxu0 0.0
      %2983 = vmatpush.msra.mxu0 0.0
      %2984 = vmatpush.msra.mxu0 0.0
      %2985 = vmatpush.msra.mxu0 0.0
      %2986 = vmatpush.msra.mxu0 0.0
      %2987 = vmatpush.msra.mxu0 0.0
      %2988 = vmatpush.msra.mxu0 0.0
      %2989 = vmatpush.msra.mxu0 0.0
      %2990 = vmatpush.msra.mxu0 0.0
      %2991 = vmatpush.msra.mxu0 %v2972
      %2992 = vmatmul.f32.gmra.mxu0 %v2974
      %v2993 = vpop.f32.mrf.mxu0
      %v2994 = vadd.f32 0.0, %v2993
      %2995 = vdwg.mxu0
      %2996 = vrot.lane.b32.xlu0 %v1202, 96
      %v2997 = vpop.permute.xlu0 %2996
      %v2999 = vsel %vm2234, %v2364, 0
      %3001 = vmatpush.msra.mxu0 0.0
      %3002 = vmatpush.msra.mxu0 0.0
      %3003 = vmatpush.msra.mxu0 0.0
      %3004 = vmatpush.msra.mxu0 0.0
      %3005 = vmatpush.msra.mxu0 0.0
      %3006 = vmatpush.msra.mxu0 0.0
      %3007 = vmatpush.msra.mxu0 0.0
      %3008 = vmatpush.msra.mxu0 0.0
      %3009 = vmatpush.msra.mxu0 0.0
      %3010 = vmatpush.msra.mxu0 0.0
      %3011 = vmatpush.msra.mxu0 0.0
      %3012 = vmatpush.msra.mxu0 0.0
      %3013 = vmatpush.msra.mxu0 0.0
      %3014 = vmatpush.msra.mxu0 0.0
      %3015 = vmatpush.msra.mxu0 0.0
      %3016 = vmatpush.msra.mxu0 %v2997
      %3017 = vmatmul.f32.gmra.mxu0 %v2999
      %v3018 = vpop.f32.mrf.mxu0
      %v3019 = vadd.f32 0.0, %v3018
      %3020 = vdwg.mxu0
      %3021 = vrot.lane.b32.xlu0 %v1205, 96
      %v3022 = vpop.permute.xlu0 %3021
      %v3024 = vsel %vm2234, %v2365, 0
      %3026 = vmatpush.msra.mxu0 0.0
      %3027 = vmatpush.msra.mxu0 0.0
      %3028 = vmatpush.msra.mxu0 0.0
      %3029 = vmatpush.msra.mxu0 0.0
      %3030 = vmatpush.msra.mxu0 0.0
      %3031 = vmatpush.msra.mxu0 0.0
      %3032 = vmatpush.msra.mxu0 0.0
      %3033 = vmatpush.msra.mxu0 0.0
      %3034 = vmatpush.msra.mxu0 0.0
      %3035 = vmatpush.msra.mxu0 0.0
      %3036 = vmatpush.msra.mxu0 0.0
      %3037 = vmatpush.msra.mxu0 0.0
      %3038 = vmatpush.msra.mxu0 0.0
      %3039 = vmatpush.msra.mxu0 0.0
      %3040 = vmatpush.msra.mxu0 0.0
      %3041 = vmatpush.msra.mxu0 %v3022
      %3042 = vmatmul.f32.gmra.mxu0 %v3024
      %v3043 = vpop.f32.mrf.mxu0
      %v3044 = vadd.f32 0.0, %v3043
      %3045 = vdwg.mxu0
      %3046 = vrot.lane.b32.xlu0 %v1208, 96
      %v3047 = vpop.permute.xlu0 %3046
      %v3049 = vsel %vm2234, %v2366, 0
      %3051 = vmatpush.msra.mxu0 0.0
      %3052 = vmatpush.msra.mxu0 0.0
      %3053 = vmatpush.msra.mxu0 0.0
      %3054 = vmatpush.msra.mxu0 0.0
      %3055 = vmatpush.msra.mxu0 0.0
      %3056 = vmatpush.msra.mxu0 0.0
      %3057 = vmatpush.msra.mxu0 0.0
      %3058 = vmatpush.msra.mxu0 0.0
      %3059 = vmatpush.msra.mxu0 0.0
      %3060 = vmatpush.msra.mxu0 0.0
      %3061 = vmatpush.msra.mxu0 0.0
      %3062 = vmatpush.msra.mxu0 0.0
      %3063 = vmatpush.msra.mxu0 0.0
      %3064 = vmatpush.msra.mxu0 0.0
      %3065 = vmatpush.msra.mxu0 0.0
      %3066 = vmatpush.msra.mxu0 %v3047
      %3067 = vmatmul.f32.gmra.mxu0 %v3049
      %v3068 = vpop.f32.mrf.mxu0
      %v3069 = vadd.f32 0.0, %v3068
      %3070 = vdwg.mxu0
      %3071 = vrot.lane.b32.xlu0 %v1211, 96
      %v3072 = vpop.permute.xlu0 %3071
      %v3074 = vsel %vm2234, %v2367, 0
      %3076 = vmatpush.msra.mxu0 0.0
      %3077 = vmatpush.msra.mxu0 0.0
      %3078 = vmatpush.msra.mxu0 0.0
      %3079 = vmatpush.msra.mxu0 0.0
      %3080 = vmatpush.msra.mxu0 0.0
      %3081 = vmatpush.msra.mxu0 0.0
      %3082 = vmatpush.msra.mxu0 0.0
      %3083 = vmatpush.msra.mxu0 0.0
      %3084 = vmatpush.msra.mxu0 0.0
      %3085 = vmatpush.msra.mxu0 0.0
      %3086 = vmatpush.msra.mxu0 0.0
      %3087 = vmatpush.msra.mxu0 0.0
      %3088 = vmatpush.msra.mxu0 0.0
      %3089 = vmatpush.msra.mxu0 0.0
      %3090 = vmatpush.msra.mxu0 0.0
      %3091 = vmatpush.msra.mxu0 %v3072
      %3092 = vmatmul.f32.gmra.mxu0 %v3074
      %v3093 = vpop.f32.mrf.mxu0
      %v3094 = vadd.f32 0.0, %v3093
      %3095 = vdwg.mxu0
      %3096 = vrot.lane.b32.xlu0 %v1214, 96
      %v3097 = vpop.permute.xlu0 %3096
      %v3099 = vsel %vm2234, %v2368, 0
      %3101 = vmatpush.msra.mxu0 0.0
      %3102 = vmatpush.msra.mxu0 0.0
      %3103 = vmatpush.msra.mxu0 0.0
      %3104 = vmatpush.msra.mxu0 0.0
      %3105 = vmatpush.msra.mxu0 0.0
      %3106 = vmatpush.msra.mxu0 0.0
      %3107 = vmatpush.msra.mxu0 0.0
      %3108 = vmatpush.msra.mxu0 0.0
      %3109 = vmatpush.msra.mxu0 0.0
      %3110 = vmatpush.msra.mxu0 0.0
      %3111 = vmatpush.msra.mxu0 0.0
      %3112 = vmatpush.msra.mxu0 0.0
      %3113 = vmatpush.msra.mxu0 0.0
      %3114 = vmatpush.msra.mxu0 0.0
      %3115 = vmatpush.msra.mxu0 0.0
      %3116 = vmatpush.msra.mxu0 %v3097
      %3117 = vmatmul.f32.gmra.mxu0 %v3099
      %v3118 = vpop.f32.mrf.mxu0
      %v3119 = vadd.f32 0.0, %v3118
      %3120 = vdwg.mxu0
      %3121 = vrot.lane.b32.xlu0 %v1217, 96
      %v3122 = vpop.permute.xlu0 %3121
      %v3124 = vsel %vm2234, %v2369, 0
      %3126 = vmatpush.msra.mxu0 0.0
      %3127 = vmatpush.msra.mxu0 0.0
      %3128 = vmatpush.msra.mxu0 0.0
      %3129 = vmatpush.msra.mxu0 0.0
      %3130 = vmatpush.msra.mxu0 0.0
      %3131 = vmatpush.msra.mxu0 0.0
      %3132 = vmatpush.msra.mxu0 0.0
      %3133 = vmatpush.msra.mxu0 0.0
      %3134 = vmatpush.msra.mxu0 0.0
      %3135 = vmatpush.msra.mxu0 0.0
      %3136 = vmatpush.msra.mxu0 0.0
      %3137 = vmatpush.msra.mxu0 0.0
      %3138 = vmatpush.msra.mxu0 0.0
      %3139 = vmatpush.msra.mxu0 0.0
      %3140 = vmatpush.msra.mxu0 0.0
      %3141 = vmatpush.msra.mxu0 %v3122
      %3142 = vmatmul.f32.gmra.mxu0 %v3124
      %v3143 = vpop.f32.mrf.mxu0
      %v3144 = vadd.f32 0.0, %v3143
      %3145 = vdwg.mxu0
      %3146 = vrot.lane.b32.xlu0 %v1220, 96
      %v3147 = vpop.permute.xlu0 %3146
      %v3149 = vsel %vm2234, %v2370, 0
      %3151 = vmatpush.msra.mxu0 0.0
      %3152 = vmatpush.msra.mxu0 0.0
      %3153 = vmatpush.msra.mxu0 0.0
      %3154 = vmatpush.msra.mxu0 0.0
      %3155 = vmatpush.msra.mxu0 0.0
      %3156 = vmatpush.msra.mxu0 0.0
      %3157 = vmatpush.msra.mxu0 0.0
      %3158 = vmatpush.msra.mxu0 0.0
      %3159 = vmatpush.msra.mxu0 0.0
      %3160 = vmatpush.msra.mxu0 0.0
      %3161 = vmatpush.msra.mxu0 0.0
      %3162 = vmatpush.msra.mxu0 0.0
      %3163 = vmatpush.msra.mxu0 0.0
      %3164 = vmatpush.msra.mxu0 0.0
      %3165 = vmatpush.msra.mxu0 0.0
      %3166 = vmatpush.msra.mxu0 %v3147
      %3167 = vmatmul.f32.gmra.mxu0 %v3149
      %v3168 = vpop.f32.mrf.mxu0
      %v3169 = vadd.f32 0.0, %v3168
      %3170 = vdwg.mxu0
      %v3203 = vrot.slane %v2419, 7
      %v3204 = vsel %vm2164, %v3203, %v2394
      %v3205 = vrot.slane %v2444, 6
      %v3206 = vsel %vm2167, %v3205, %v3204
      %v3207 = vrot.slane %v2469, 5
      %v3208 = vsel %vm2170, %v3207, %v3206
      %v3209 = vrot.slane %v2494, 4
      %v3210 = vsel %vm2173, %v3209, %v3208
      %v3211 = vrot.slane %v2519, 3
      %v3212 = vsel %vm2176, %v3211, %v3210
      %v3213 = vrot.slane %v2544, 2
      %v3214 = vsel %vm2179, %v3213, %v3212
      %v3215 = vrot.slane %v2569, 1
      %v3216 = vsel %vm2182, %v3215, %v3214
      %v3217 = vrot.slane %v2619, 7
      %v3218 = vsel %vm2164, %v3217, %v2594
      %v3219 = vrot.slane %v2644, 6
      %v3220 = vsel %vm2167, %v3219, %v3218
      %v3221 = vrot.slane %v2669, 5
      %v3222 = vsel %vm2170, %v3221, %v3220
      %v3223 = vrot.slane %v2694, 4
      %v3224 = vsel %vm2173, %v3223, %v3222
      %v3225 = vrot.slane %v2719, 3
      %v3226 = vsel %vm2176, %v3225, %v3224
      %v3227 = vrot.slane %v2744, 2
      %v3228 = vsel %vm2179, %v3227, %v3226
      %v3229 = vrot.slane %v2769, 1
      %v3230 = vsel %vm2182, %v3229, %v3228
      %v3231 = vrot.slane %v2819, 7
      %v3232 = vsel %vm2164, %v3231, %v2794
      %v3233 = vrot.slane %v2844, 6
      %v3234 = vsel %vm2167, %v3233, %v3232
      %v3235 = vrot.slane %v2869, 5
      %v3236 = vsel %vm2170, %v3235, %v3234
      %v3237 = vrot.slane %v2894, 4
      %v3238 = vsel %vm2173, %v3237, %v3236
      %v3239 = vrot.slane %v2919, 3
      %v3240 = vsel %vm2176, %v3239, %v3238
      %v3241 = vrot.slane %v2944, 2
      %v3242 = vsel %vm2179, %v3241, %v3240
      %v3243 = vrot.slane %v2969, 1
      %v3244 = vsel %vm2182, %v3243, %v3242
      %v3245 = vrot.slane %v3019, 7
      %v3246 = vsel %vm2164, %v3245, %v2994
      %v3247 = vrot.slane %v3044, 6
      %v3248 = vsel %vm2167, %v3247, %v3246
      %v3249 = vrot.slane %v3069, 5
      %v3250 = vsel %vm2170, %v3249, %v3248
      %v3251 = vrot.slane %v3094, 4
      %v3252 = vsel %vm2173, %v3251, %v3250
      %v3253 = vrot.slane %v3119, 3
      %v3254 = vsel %vm2176, %v3253, %v3252
      %v3255 = vrot.slane %v3144, 2
      %v3256 = vsel %vm2179, %v3255, %v3254
      %v3257 = vrot.slane %v3169, 1
      %v3258 = vsel %vm2182, %v3257, %v3256
      %3263 = vst.msk [vmem:[%s467] sm:$0xff] %vm763, %v3216
      %3264 = vst.msk [vmem:[%s467 + $0x8] sm:$0xff] %vm763, %v3230
      %3265 = vst.msk [vmem:[%s467 + $0x10] sm:$0xff] %vm763, %v3244
      %3266 = vst.msk [vmem:[%s467 + $0x18] sm:$0xff] %vm763, %v3258
      %3267 = vst.msk [vmem:[%s473] sm:$0xff] %vm2234, %v2335
      %3268 = vst.msk [vmem:[%s473 + $0x8] sm:$0xff] %vm2234, %v2336
      %3269 = vst.msk [vmem:[%s473 + $0x10] sm:$0xff] %vm2234, %v2337
      %3270 = vst.msk [vmem:[%s473 + $0x18] sm:$0xff] %vm2234, %v2338
      %s3271 = smul.u32 4, %s24
      %p3272 = scmp.lt.s32.totalorder %s3271, 7
      %s3273 = scalar_select %p3272, %s3271, 7
      %s3274 = smul.addr %s3273, 8
      %s3275 = scalar_lea.vmem %s11, %s3274
      %s3276 = smul.u32 4, %s24
      %p3277 = scmp.lt.s32.totalorder %s3276, 7
      %s3278 = scalar_select %p3277, %s3276, 7
      %s3279 = smul.addr %s3278, 8
      %s3280 = scalar_lea.vmem %s12, %s3279
      // Predicated region
      $region65: #{tpu_custom_call.1} parent=63 // pred_check
        %p3281 = pneg %p288
      $region66: #{tpu_custom_call.1} parent=63 // pred_check_branch
        %3283 = sbr.rel (%p3281) target = $region68
      $region67: #{tpu_custom_call.1} parent=63 // pred_region
        %s3284 = smul.u32 4, %s24
      $region68: #{tpu_custom_call.1} parent=63 // pred_fallthru
        _
      // Predicated region
      $region69: #{tpu_custom_call.1} parent=63 // pred_check
        %p3285 = pneg %p314
      $region70: #{tpu_custom_call.1} parent=63 // pred_check_branch
        %3287 = sbr.rel (%p3285) target = $region72
      $region71: #{tpu_custom_call.1} parent=63 // pred_region
        %s3288 = smul.u32 4, %s24
      $region72: #{tpu_custom_call.1} parent=63 // pred_fallthru
        _
    $region64: #{tpu_custom_call.1} parent=5 // pred_fallthru
      _
    %p3289 = scmp.le.s32.totalorder 2, %s19
    // Predicated region
    $region73: #{tpu_custom_call.1} parent=5 // pred_check
      %p3290 = pneg %p3289
    $region74: #{tpu_custom_call.1} parent=5 // pred_check_branch
      %3292 = sbr.rel (%p3290) target = $region76
    $region75: #{tpu_custom_call.1} parent=5 // pred_region
      %s3293 = ssub.s32 %s19, 2
      // Predicated region
      $region77: #{tpu_custom_call.1} parent=75 // pred_check
        %p3294 = pneg %p294
      $region78: #{tpu_custom_call.1} parent=75 // pred_check_branch
        %3296 = sbr.rel (%p3294) target = $region80
      $region79: #{tpu_custom_call.1} parent=75 // pred_region
        %s3297 = smul.u32 4, %s25
        %p3298 = scmp.lt.s32.totalorder %s3297, 7
        %s3299 = scalar_select %p3298, %s3297, 7
        %s3300 = smul.addr %s3299, 8
        %s3301 = scalar_lea.vmem %s11, %s3300
      $region80: #{tpu_custom_call.1} parent=75 // pred_fallthru
        _
      // Predicated region
      $region81: #{tpu_custom_call.1} parent=75 // pred_check
        %p3302 = pneg %p320
      $region82: #{tpu_custom_call.1} parent=75 // pred_check_branch
        %3304 = sbr.rel (%p3302) target = $region84
      $region83: #{tpu_custom_call.1} parent=75 // pred_region
        %s3305 = smul.u32 4, %s25
        %p3306 = scmp.lt.s32.totalorder %s3305, 7
        %s3307 = scalar_select %p3306, %s3305, 7
        %s3308 = smul.addr %s3307, 8
        %s3309 = scalar_lea.vmem %s12, %s3308
      $region84: #{tpu_custom_call.1} parent=75 // pred_fallthru
        _
    $region76: #{tpu_custom_call.1} parent=5 // pred_fallthru
      _
  $region6: #{tpu_custom_call.1} parent=0 // loop_footer
    %s23 = sadd.s32 1, %s19
  $region7: #{tpu_custom_call.1} parent=0 // loop_footer_branch
    %18 = sbr.rel target = $region3
  $region8: #{tpu_custom_call.1} parent=0 // loop_exit
    _

</llo_original>
